<compile_context>
chip_gen: v5e
topology: v5e:2x2
jax: 0.10.0
libtpu: 0.0.40
codegen_flags: <defaults>
</compile_context>

<pallas_src>
import math
import numpy as np
import jax
import jax.numpy as jnp
from jax.experimental import pallas as pl
from jax.experimental.pallas import tpu as pltpu


# ----------------------------------------------------------------------------
# host-side (numpy) constant builders
# ----------------------------------------------------------------------------
def _gaussian_1d(size=11, sigma=1.5):
    coords = np.arange(size, dtype=np.float64) - (size - 1) / 2.0
    g = np.exp(-(coords ** 2) / (2.0 * sigma ** 2))
    return (g / g.sum()).astype(np.float32)


GAUSS_WIN = _gaussian_1d(11, 1.5)


def _ssim_band_matrices(H, W, win):
    """Banded matrices so that filt(x) = Bh @ x @ Bw == separable 'valid' conv."""
    K = int(win.shape[0])
    Ho, Wo = H - K + 1, W - K + 1
    Bh = np.zeros((Ho, H), np.float32)
    for i in range(Ho):
        Bh[i, i:i + K] = win
    Bw = np.zeros((W, Wo), np.float32)
    for j in range(Wo):
        Bw[j:j + K, j] = win
    return Bh, Bw


def _conv_band_matrix(w, W):
    """w: (Cout, Cin, 3, 3).  Returns Mcat (Cin*W, 3*Cout*W).

    With features laid out as (rows, Cin*W) (channel blocks along lanes),
    (X @ Mcat)[:, k*Cout*W:(k+1)*Cout*W] is the column pass (dj taps, channel
    contraction, zero 'same' padding along W) of the 3x3 conv for row offset
    di = (-1, 0, +1)[k]."""
    Cout, Cin, _, _ = w.shape
    M = np.zeros((3, Cin * W, Cout * W), np.float32)
    for k, di in enumerate((-1, 0, 1)):
        for o in range(Cout):
            for c in range(Cin):
                for dj in (-1, 0, 1):
                    for j in range(W):
                        jp = j + dj
                        if 0 <= jp < W:
                            M[k, c * W + jp, o * W + j] = w[o, c, di + 1, dj + 1]
    return np.concatenate([M[0], M[1], M[2]], axis=1)


def _row_shift_matrix(H, n_img):
    """Shcat (R, 3R), R = n_img*H.  Left-multiplying the di-stacked column-pass
    results applies the row offsets of the 3x3 conv with zero padding at each
    per-image row boundary (no cross-image leakage in the stacked slab)."""
    R = n_img * H
    Sh = np.zeros((3, R, R), np.float32)
    for k, di in enumerate((-1, 0, 1)):
        for i in range(R):
            ip = i + di
            if 0 <= ip < R and (ip // H == i // H):
                Sh[k, i, ip] = 1.0
    return np.concatenate([Sh[0], Sh[1], Sh[2]], axis=1)


def _channel_row(vec, W):
    """(C,) -> (1, C*W) lane row, each channel's value repeated across its W lanes."""
    return np.repeat(np.asarray(vec, np.float32), W)[None, :]


def make_lpips_params(c_in=3, c1=8, c2=16, seed=42):
    # TODO(synk): synthetic deterministic backbone stands in for pretrained LPIPS.
    rng = np.random.default_rng(seed)
    w1 = (0.2 * rng.standard_normal((c1, c_in, 3, 3))).astype(np.float32)
    b1 = np.zeros((c1,), np.float32)
    w2 = (0.2 * rng.standard_normal((c2, c1, 3, 3))).astype(np.float32)
    b2 = np.zeros((c2,), np.float32)
    lw1 = np.abs(rng.standard_normal((c1,))).astype(np.float32)
    lw2 = np.abs(rng.standard_normal((c2,))).astype(np.float32)
    return dict(w1=w1, b1=b1, w2=w2, b2=b2, lw1=lw1, lw2=lw2, c1=c1, c2=c2)


# ----------------------------------------------------------------------------
# fused PSNR + SSIM + LPIPS kernel (grid over batch, one HBM read per image)
# ----------------------------------------------------------------------------
def _make_fused_kernel(H, W, K, c1, c2):
    Ho, Wo = H - K + 1, W - K + 1
    SSIM_C1 = (0.01 * 255.0) ** 2
    SSIM_C2 = (0.03 * 255.0) ** 2
    inv_n = 1.0 / (3.0 * H * W)
    inv_hw = 1.0 / (H * W)
    log10_scale = 10.0 / math.log(10.0)
    psnr_eps = 1e-8                      # pyiqa adds eps to mse -> no log(0)
    cw1, cw2 = c1 * W, c2 * W

    def kernel(p_ref, t_ref, bh_ref, bw_ref, sh_ref,
               m1_ref, b1_ref, m2_ref, b2_ref, lw1_ref, lw2_ref,
               psnr_ref, ssim_ref, lpips_ref):
        ones_row = jnp.ones((1, 1, 128), jnp.float32)

        # cast in-kernel (inputs keep their original dtype through HBM/DMA)
        r1 = p_ref[0, 0].astype(jnp.float32)
        g1 = p_ref[0, 1].astype(jnp.float32)
        b1 = p_ref[0, 2].astype(jnp.float32)
        r2 = t_ref[0, 0].astype(jnp.float32)
        g2 = t_ref[0, 1].astype(jnp.float32)
        b2 = t_ref[0, 2].astype(jnp.float32)

        # ---------------- PSNR (RGB MSE, per image) -------------------------
        mse = (jnp.sum((r1 - r2) ** 2, keepdims=True)
               + jnp.sum((g1 - g2) ** 2, keepdims=True)
               + jnp.sum((b1 - b2) ** 2, keepdims=True)) * inv_n        # (1,1)
        psnr = -log10_scale * jnp.log(mse + psnr_eps)                   # 10*log10(1/(mse+eps))
        psnr_ref[...] = psnr * ones_row

        # ---------------- SSIM (Y channel, 2 batched MXU passes) ------------
        y1 = 65.481 * r1 + 128.553 * g1 + 24.966 * b1 + 16.0
        y2 = 65.481 * r2 + 128.553 * g2 + 24.966 * b2 + 16.0
        # 5 'valid' Gaussian filterings batched into 2 matmuls.
        cat_l = jnp.concatenate([y1, y2, y1 * y1, y2 * y2, y1 * y2], axis=1)   # (H, 5W)
        trow = jnp.dot(bh_ref[...], cat_l, preferred_element_type=jnp.float32)  # (Ho, 5W)
        cat_s = jnp.concatenate(
            [trow[:, k * W:(k + 1) * W] for k in range(5)], axis=0)             # (5Ho, W)
        filt = jnp.dot(cat_s, bw_ref[...], preferred_element_type=jnp.float32)  # (5Ho, Wo)
        mu1 = filt[0 * Ho:1 * Ho]
        mu2 = filt[1 * Ho:2 * Ho]
        s1 = filt[2 * Ho:3 * Ho] - mu1 * mu1
        s2 = filt[3 * Ho:4 * Ho] - mu2 * mu2
        s12 = filt[4 * Ho:5 * Ho] - mu1 * mu2
        ssim_map = ((2.0 * mu1 * mu2 + SSIM_C1) * (2.0 * s12 + SSIM_C2)) / \
                   ((mu1 * mu1 + mu2 * mu2 + SSIM_C1) * (s1 + s2 + SSIM_C2))
        ssim_ref[...] = jnp.mean(ssim_map, keepdims=True) * ones_row

        # ---------------- LPIPS (synthetic backbone, pure-MXU 3x3 convs) ----
        # Feature slab layout: (2H, C*W); pred rows on top of target rows,
        # channel blocks tiled along lanes (lane-dense: 48 -> 128 -> 256 lanes).
        x = jnp.concatenate(
            [jnp.concatenate([r1, g1, b1], axis=1),
             jnp.concatenate([r2, g2, b2], axis=1)], axis=0)            # (2H, 3W)
        sh = sh_ref[...]                                                # (2H, 6H)

        def conv3x3_relu(xin, mcat, bias_row, cw_out):
            # column taps + channel contraction: one matmul
            a = jnp.dot(xin, mcat, preferred_element_type=jnp.float32)  # (2H, 3*cw_out)
            # restack the three di blocks along sublanes (128-aligned lane slices)
            a_stack = jnp.concatenate(
                [a[:, 0:cw_out], a[:, cw_out:2 * cw_out], a[:, 2 * cw_out:3 * cw_out]],
                axis=0)                                                  # (6H, cw_out)
            # row taps + per-image zero padding: one matmul
            pre = jnp.dot(sh, a_stack, preferred_element_type=jnp.float32)  # (2H, cw_out)
            return jnp.maximum(pre + bias_row, 0.0)

        f1 = conv3x3_relu(x, m1_ref[...], b1_ref[...], cw1)             # (2H, c1*W)
        f2 = conv3x3_relu(f1, m2_ref[...], b2_ref[...], cw2)            # (2H, c2*W)

        def stage_dist(feat, lw_row, c):
            fa, fb = feat[:H], feat[H:]                                  # (H, c*W) each
            na2 = jnp.zeros((H, W), jnp.float32)
            nb2 = jnp.zeros((H, W), jnp.float32)
            for o in range(c):                                           # channel-norm sums
                sa = fa[:, o * W:(o + 1) * W]
                sb = fb[:, o * W:(o + 1) * W]
                na2 = na2 + sa * sa
                nb2 = nb2 + sb * sb
            inv_na = jnp.tile(jax.lax.rsqrt(na2 + 1e-10), (1, c))        # (H, c*W)
            inv_nb = jnp.tile(jax.lax.rsqrt(nb2 + 1e-10), (1, c))
            diff = fa * inv_na - fb * inv_nb
            return jnp.sum(diff * diff * lw_row, keepdims=True) * inv_hw  # (1,1)

        lp = stage_dist(f1, lw1_ref[...], c1) + stage_dist(f2, lw2_ref[...], c2)
        lpips_ref[...] = lp * ones_row

    return kernel


# ----------------------------------------------------------------------------
# Module-equivalent wrapper
# ----------------------------------------------------------------------------
class ImageQualityMetricsPallas:
    def __init__(self):
        self.params = make_lpips_params()
        self._cache = {}

    def _get_fn(self, N, H, W, dtype):
        key = (N, H, W, str(dtype))
        if key in self._cache:
            return self._cache[key]

        p = self.params
        c1, c2 = p["c1"], p["c2"]
        K = int(GAUSS_WIN.shape[0])
        bh_np, bw_np = _ssim_band_matrices(H, W, GAUSS_WIN)

        bh = jnp.asarray(bh_np)                               # (Ho, H)
        bw = jnp.asarray(bw_np)                               # (W, Wo)
        sh = jnp.asarray(_row_shift_matrix(H, 2))             # (2H, 6H)
        m1 = jnp.asarray(_conv_band_matrix(p["w1"], W))       # (3W,  3*c1*W)
        b1r = jnp.asarray(_channel_row(p["b1"], W))           # (1, c1*W)
        m2 = jnp.asarray(_conv_band_matrix(p["w2"], W))       # (c1*W, 3*c2*W)
        b2r = jnp.asarray(_channel_row(p["b2"], W))           # (1, c2*W)
        lw1r = jnp.asarray(_channel_row(p["lw1"], W))         # (1, c1*W)
        lw2r = jnp.asarray(_channel_row(p["lw2"], W))         # (1, c2*W)

        kern = _make_fused_kernel(H, W, K, c1, c2)
        const2d = lambda arr: pl.BlockSpec(arr.shape, lambda n: (0, 0))

        call = pl.pallas_call(
            kern,
            out_shape=(jax.ShapeDtypeStruct((N, 1, 128), jnp.float32),
                       jax.ShapeDtypeStruct((N, 1, 128), jnp.float32),
                       jax.ShapeDtypeStruct((N, 1, 128), jnp.float32)),
            grid=(N,),
            in_specs=[
                pl.BlockSpec((1, 3, H, W), lambda n: (n, 0, 0, 0)),
                pl.BlockSpec((1, 3, H, W), lambda n: (n, 0, 0, 0)),
                const2d(bh), const2d(bw), const2d(sh),
                const2d(m1), const2d(b1r),
                const2d(m2), const2d(b2r),
                const2d(lw1r), const2d(lw2r),
            ],
            out_specs=(
                pl.BlockSpec((1, 1, 128), lambda n: (n, 0, 0)),
                pl.BlockSpec((1, 1, 128), lambda n: (n, 0, 0)),
                pl.BlockSpec((1, 1, 128), lambda n: (n, 0, 0)),
            ),
            compiler_params=pltpu.CompilerParams(
                dimension_semantics=("parallel",),
                vmem_limit_bytes=32 * 1024 * 1024),
        )

        def fn(preds, targets):
            psnr_o, ssim_o, lpips_o = call(
                preds, targets, bh, bw, sh, m1, b1r, m2, b2r, lw1r, lw2r)
            return (jnp.mean(psnr_o[:, 0, 0]),
                    jnp.mean(ssim_o[:, 0, 0]),
                    jnp.mean(lpips_o[:, 0, 0]))

        fn = jax.jit(fn)
        self._cache[key] = fn
        return fn

    def forward(self, preds, targets):
        N, C, H, W = preds.shape
        assert C == 3, "PSNR/SSIM/LPIPS path assumes RGB (3 channels)"
        assert H >= 11 and W >= 11, "SSIM needs >= 11x11 spatial extent"
        fn = self._get_fn(N, H, W, preds.dtype)
        psnr, ssim, lpips = jax.block_until_ready(fn(preds, targets))
        # behave like .mean().item()
        return {"PSNR": float(psnr), "SSIM": float(ssim), "LPIPS": float(lpips)}

    __call__ = forward

    # TODO(synk): no_ref()/full() (BRISQUE, NIQE) require pretrained NSS model
    #             statistics; not implementable as a self-contained kernel.


if __name__ == "__main__":
    key = jax.random.PRNGKey(0)
    k1, k2 = jax.random.split(key)
    # NCHW, RGB, values in [0, 1]
    preds = jax.random.uniform(k1, (2, 3, 16, 16), jnp.float32)
    noise = 0.05 * jax.random.normal(k2, (2, 3, 16, 16), jnp.float32)
    targets = jnp.clip(preds + noise, 0.0, 1.0)

    metrics = ImageQualityMetricsPallas()
    result = metrics(preds, targets)  # forward(): {'PSNR', 'SSIM', 'LPIPS'}

    assert all(np.isfinite(v) for v in result.values())
    print("KERNEL_OK")
</pallas_src>

<mosaic_0001>
module attributes {stable_mosaic.version = 11 : i64} {
  func.func @kernel(%arg0: i32, %arg1: memref<1x3x16x16xf32, #tpu.memory_space<vmem>>, %arg2: memref<1x3x16x16xf32, #tpu.memory_space<vmem>>, %arg3: memref<6x16xf32, #tpu.memory_space<vmem>>, %arg4: memref<16x6xf32, #tpu.memory_space<vmem>>, %arg5: memref<32x96xf32, #tpu.memory_space<vmem>>, %arg6: memref<48x384xf32, #tpu.memory_space<vmem>>, %arg7: memref<1x128xf32, #tpu.memory_space<vmem>>, %arg8: memref<128x768xf32, #tpu.memory_space<vmem>>, %arg9: memref<1x256xf32, #tpu.memory_space<vmem>>, %arg10: memref<1x128xf32, #tpu.memory_space<vmem>>, %arg11: memref<1x256xf32, #tpu.memory_space<vmem>>, %arg12: memref<1x1x128xf32, #tpu.memory_space<vmem>>, %arg13: memref<1x1x128xf32, #tpu.memory_space<vmem>>, %arg14: memref<1x1x128xf32, #tpu.memory_space<vmem>>) attributes {dimension_semantics = [#tpu.dimension_semantics<parallel>], iteration_bounds = array<i64: 2>, scalar_prefetch = 0 : i64, scratch_operands = 0 : i64, tpu.core_type = #tpu.core_type<tc>, window_params = [{transform_indices = @transform_0, window_bounds = array<i64: 1, 3, 16, 16>}, {transform_indices = @transform_1, window_bounds = array<i64: 1, 3, 16, 16>}, {pipeline_mode = #tpu.pipeline_mode<synchronous>, transform_indices = @transform_2, window_bounds = array<i64: 6, 16>}, {pipeline_mode = #tpu.pipeline_mode<synchronous>, transform_indices = @transform_3, window_bounds = array<i64: 16, 6>}, {pipeline_mode = #tpu.pipeline_mode<synchronous>, transform_indices = @transform_4, window_bounds = array<i64: 32, 96>}, {pipeline_mode = #tpu.pipeline_mode<synchronous>, transform_indices = @transform_5, window_bounds = array<i64: 48, 384>}, {pipeline_mode = #tpu.pipeline_mode<synchronous>, transform_indices = @transform_6, window_bounds = array<i64: 1, 128>}, {pipeline_mode = #tpu.pipeline_mode<synchronous>, transform_indices = @transform_7, window_bounds = array<i64: 128, 768>}, {pipeline_mode = #tpu.pipeline_mode<synchronous>, transform_indices = @transform_8, window_bounds = array<i64: 1, 256>}, {pipeline_mode = #tpu.pipeline_mode<synchronous>, transform_indices = @transform_9, window_bounds = array<i64: 1, 128>}, {pipeline_mode = #tpu.pipeline_mode<synchronous>, transform_indices = @transform_10, window_bounds = array<i64: 1, 256>}, {transform_indices = @transform_11, window_bounds = array<i64: 1, 1, 128>}, {transform_indices = @transform_12, window_bounds = array<i64: 1, 1, 128>}, {transform_indices = @transform_13, window_bounds = array<i64: 1, 1, 128>}]} {
    %cst = arith.constant 1.000000e+00 : f32
    %0 = vector.broadcast %cst : f32 to vector<1x1x128xf32>
    %c0 = arith.constant 0 : index
    %c0_0 = arith.constant 0 : index
    %c0_1 = arith.constant 0 : index
    %c0_2 = arith.constant 0 : index
    %1 = vector.load %arg1[%c0, %c0_0, %c0_1, %c0_2] : memref<1x3x16x16xf32, #tpu.memory_space<vmem>>, vector<1x1x16x16xf32>
    %2 = vector.shape_cast %1 : vector<1x1x16x16xf32> to vector<16x16xf32>
    %c0_3 = arith.constant 0 : index
    %c1 = arith.constant 1 : index
    %c0_4 = arith.constant 0 : index
    %c0_5 = arith.constant 0 : index
    %3 = vector.load %arg1[%c0_3, %c1, %c0_4, %c0_5] : memref<1x3x16x16xf32, #tpu.memory_space<vmem>>, vector<1x1x16x16xf32>
    %4 = vector.shape_cast %3 : vector<1x1x16x16xf32> to vector<16x16xf32>
    %c0_6 = arith.constant 0 : index
    %c2 = arith.constant 2 : index
    %c0_7 = arith.constant 0 : index
    %c0_8 = arith.constant 0 : index
    %5 = vector.load %arg1[%c0_6, %c2, %c0_7, %c0_8] : memref<1x3x16x16xf32, #tpu.memory_space<vmem>>, vector<1x1x16x16xf32>
    %6 = vector.shape_cast %5 : vector<1x1x16x16xf32> to vector<16x16xf32>
    %c0_9 = arith.constant 0 : index
    %c0_10 = arith.constant 0 : index
    %c0_11 = arith.constant 0 : index
    %c0_12 = arith.constant 0 : index
    %7 = vector.load %arg2[%c0_9, %c0_10, %c0_11, %c0_12] : memref<1x3x16x16xf32, #tpu.memory_space<vmem>>, vector<1x1x16x16xf32>
    %8 = vector.shape_cast %7 : vector<1x1x16x16xf32> to vector<16x16xf32>
    %c0_13 = arith.constant 0 : index
    %c1_14 = arith.constant 1 : index
    %c0_15 = arith.constant 0 : index
    %c0_16 = arith.constant 0 : index
    %9 = vector.load %arg2[%c0_13, %c1_14, %c0_15, %c0_16] : memref<1x3x16x16xf32, #tpu.memory_space<vmem>>, vector<1x1x16x16xf32>
    %10 = vector.shape_cast %9 : vector<1x1x16x16xf32> to vector<16x16xf32>
    %c0_17 = arith.constant 0 : index
    %c2_18 = arith.constant 2 : index
    %c0_19 = arith.constant 0 : index
    %c0_20 = arith.constant 0 : index
    %11 = vector.load %arg2[%c0_17, %c2_18, %c0_19, %c0_20] : memref<1x3x16x16xf32, #tpu.memory_space<vmem>>, vector<1x1x16x16xf32>
    %12 = vector.shape_cast %11 : vector<1x1x16x16xf32> to vector<16x16xf32>
    %13 = arith.subf %2, %8 : vector<16x16xf32>
    %14 = arith.mulf %13, %13 : vector<16x16xf32>
    %15 = vector.shape_cast %14 : vector<16x16xf32> to vector<1x16x16xf32>
    %cst_21 = arith.constant dense<0.000000e+00> : vector<1xf32>
    %16 = vector.multi_reduction <add>, %15, %cst_21 [1, 2] : vector<1x16x16xf32> to vector<1xf32>
    %17 = vector.shape_cast %16 : vector<1xf32> to vector<1x1x1xf32>
    %18 = vector.extract %17[0, 0, 0] : f32 from vector<1x1x1xf32>
    %19 = vector.broadcast %18 : f32 to vector<1x1xf32>
    %20 = arith.subf %4, %10 : vector<16x16xf32>
    %21 = arith.mulf %20, %20 : vector<16x16xf32>
    %22 = vector.shape_cast %21 : vector<16x16xf32> to vector<1x16x16xf32>
    %cst_22 = arith.constant dense<0.000000e+00> : vector<1xf32>
    %23 = vector.multi_reduction <add>, %22, %cst_22 [1, 2] : vector<1x16x16xf32> to vector<1xf32>
    %24 = vector.shape_cast %23 : vector<1xf32> to vector<1x1x1xf32>
    %25 = vector.extract %24[0, 0, 0] : f32 from vector<1x1x1xf32>
    %26 = vector.broadcast %25 : f32 to vector<1x1xf32>
    %27 = arith.addf %19, %26 : vector<1x1xf32>
    %28 = arith.subf %6, %12 : vector<16x16xf32>
    %29 = arith.mulf %28, %28 : vector<16x16xf32>
    %30 = vector.shape_cast %29 : vector<16x16xf32> to vector<1x16x16xf32>
    %cst_23 = arith.constant dense<0.000000e+00> : vector<1xf32>
    %31 = vector.multi_reduction <add>, %30, %cst_23 [1, 2] : vector<1x16x16xf32> to vector<1xf32>
    %32 = vector.shape_cast %31 : vector<1xf32> to vector<1x1x1xf32>
    %33 = vector.extract %32[0, 0, 0] : f32 from vector<1x1x1xf32>
    %34 = vector.broadcast %33 : f32 to vector<1x1xf32>
    %35 = arith.addf %27, %34 : vector<1x1xf32>
    %cst_24 = arith.constant 0.00130208337 : f32
    %36 = vector.broadcast %cst_24 : f32 to vector<1x1xf32>
    %37 = arith.mulf %35, %36 : vector<1x1xf32>
    %cst_25 = arith.constant 9.99999993E-9 : f32
    %38 = vector.broadcast %cst_25 : f32 to vector<1x1xf32>
    %39 = arith.addf %37, %38 : vector<1x1xf32>
    %40 = math.log %39 : vector<1x1xf32>
    %cst_26 = arith.constant -4.34294462 : f32
    %41 = vector.broadcast %cst_26 : f32 to vector<1x1xf32>
    %42 = arith.mulf %41, %40 : vector<1x1xf32>
    %43 = vector.shape_cast %42 : vector<1x1xf32> to vector<1x1x1xf32>
    %44 = vector.broadcast %43 : vector<1x1x1xf32> to vector<1x1x128xf32>
    %45 = arith.mulf %44, %0 : vector<1x1x128xf32>
    %c0_27 = arith.constant 0 : index
    %c0_28 = arith.constant 0 : index
    %c0_29 = arith.constant 0 : index
    %46 = vector.load %arg12[%c0_27, %c0_28, %c0_29] : memref<1x1x128xf32, #tpu.memory_space<vmem>>, vector<1x1x128xf32>
    tpu.vector_store %arg12[%c0_27, %c0_28, %c0_29], %45 {strides = array<i32>} : memref<1x1x128xf32, #tpu.memory_space<vmem>>, vector<1x1x128xf32>,
    %cst_30 = arith.constant 6.548100e+01 : f32
    %47 = vector.broadcast %cst_30 : f32 to vector<16x16xf32>
    %48 = arith.mulf %47, %2 : vector<16x16xf32>
    %cst_31 = arith.constant 1.285530e+02 : f32
    %49 = vector.broadcast %cst_31 : f32 to vector<16x16xf32>
    %50 = arith.mulf %49, %4 : vector<16x16xf32>
    %51 = arith.addf %48, %50 : vector<16x16xf32>
    %cst_32 = arith.constant 2.496600e+01 : f32
    %52 = vector.broadcast %cst_32 : f32 to vector<16x16xf32>
    %53 = arith.mulf %52, %6 : vector<16x16xf32>
    %54 = arith.addf %51, %53 : vector<16x16xf32>
    %cst_33 = arith.constant 1.600000e+01 : f32
    %55 = vector.broadcast %cst_33 : f32 to vector<16x16xf32>
    %56 = arith.addf %54, %55 : vector<16x16xf32>
    %cst_34 = arith.constant 6.548100e+01 : f32
    %57 = vector.broadcast %cst_34 : f32 to vector<16x16xf32>
    %58 = arith.mulf %57, %8 : vector<16x16xf32>
    %cst_35 = arith.constant 1.285530e+02 : f32
    %59 = vector.broadcast %cst_35 : f32 to vector<16x16xf32>
    %60 = arith.mulf %59, %10 : vector<16x16xf32>
    %61 = arith.addf %58, %60 : vector<16x16xf32>
    %cst_36 = arith.constant 2.496600e+01 : f32
    %62 = vector.broadcast %cst_36 : f32 to vector<16x16xf32>
    %63 = arith.mulf %62, %12 : vector<16x16xf32>
    %64 = arith.addf %61, %63 : vector<16x16xf32>
    %cst_37 = arith.constant 1.600000e+01 : f32
    %65 = vector.broadcast %cst_37 : f32 to vector<16x16xf32>
    %66 = arith.addf %64, %65 : vector<16x16xf32>
    %67 = arith.mulf %56, %56 : vector<16x16xf32>
    %68 = arith.mulf %66, %66 : vector<16x16xf32>
    %69 = arith.mulf %56, %66 : vector<16x16xf32>
    %70 = tpu.concatenate %56, %66, %67, %68, %69 in 1 : vector<16x16xf32>, vector<16x16xf32>, vector<16x16xf32>, vector<16x16xf32>, vector<16x16xf32> -> vector<16x80xf32>
    %c0_38 = arith.constant 0 : index
    %c0_39 = arith.constant 0 : index
    %71 = vector.load %arg3[%c0_38, %c0_39] : memref<6x16xf32, #tpu.memory_space<vmem>>, vector<6x16xf32>
    %cst_40 = arith.constant dense<0.000000e+00> : vector<6x80xf32>
    %72 = tpu.matmul %71, %70, %cst_40 {dimension_numbers = #tpu.dot_dimension_numbers<[1], [0], [0], [1], [0, 0, 1, 1], [], []>} : vector<6x16xf32>, vector<16x80xf32>, vector<6x80xf32> -> vector<6x80xf32>
    %73 = vector.extract_strided_slice %72 {offsets = [0, 0], sizes = [6, 16], strides = [1, 1]} : vector<6x80xf32> to vector<6x16xf32>
    %74 = vector.extract_strided_slice %72 {offsets = [0, 16], sizes = [6, 16], strides = [1, 1]} : vector<6x80xf32> to vector<6x16xf32>
    %75 = vector.extract_strided_slice %72 {offsets = [0, 32], sizes = [6, 16], strides = [1, 1]} : vector<6x80xf32> to vector<6x16xf32>
    %76 = vector.extract_strided_slice %72 {offsets = [0, 48], sizes = [6, 16], strides = [1, 1]} : vector<6x80xf32> to vector<6x16xf32>
    %77 = vector.extract_strided_slice %72 {offsets = [0, 64], sizes = [6, 16], strides = [1, 1]} : vector<6x80xf32> to vector<6x16xf32>
    %78 = tpu.concatenate %73, %74, %75, %76, %77 in 0 : vector<6x16xf32>, vector<6x16xf32>, vector<6x16xf32>, vector<6x16xf32>, vector<6x16xf32> -> vector<30x16xf32>
    %c0_41 = arith.constant 0 : index
    %c0_42 = arith.constant 0 : index
    %79 = vector.load %arg4[%c0_41, %c0_42] : memref<16x6xf32, #tpu.memory_space<vmem>>, vector<16x6xf32>
    %cst_43 = arith.constant dense<0.000000e+00> : vector<30x6xf32>
    %80 = tpu.matmul %78, %79, %cst_43 {dimension_numbers = #tpu.dot_dimension_numbers<[1], [0], [0], [1], [0, 0, 1, 1], [], []>} : vector<30x16xf32>, vector<16x6xf32>, vector<30x6xf32> -> vector<30x6xf32>
    %81 = vector.extract_strided_slice %80 {offsets = [0, 0], sizes = [6, 6], strides = [1, 1]} : vector<30x6xf32> to vector<6x6xf32>
    %82 = vector.extract_strided_slice %80 {offsets = [6, 0], sizes = [6, 6], strides = [1, 1]} : vector<30x6xf32> to vector<6x6xf32>
    %83 = vector.extract_strided_slice %80 {offsets = [12, 0], sizes = [6, 6], strides = [1, 1]} : vector<30x6xf32> to vector<6x6xf32>
    %84 = arith.mulf %81, %81 : vector<6x6xf32>
    %85 = arith.subf %83, %84 : vector<6x6xf32>
    %86 = vector.extract_strided_slice %80 {offsets = [18, 0], sizes = [6, 6], strides = [1, 1]} : vector<30x6xf32> to vector<6x6xf32>
    %87 = arith.mulf %82, %82 : vector<6x6xf32>
    %88 = arith.subf %86, %87 : vector<6x6xf32>
    %89 = vector.extract_strided_slice %80 {offsets = [24, 0], sizes = [6, 6], strides = [1, 1]} : vector<30x6xf32> to vector<6x6xf32>
    %90 = arith.mulf %81, %82 : vector<6x6xf32>
    %91 = arith.subf %89, %90 : vector<6x6xf32>
    %cst_44 = arith.constant 2.000000e+00 : f32
    %92 = vector.broadcast %cst_44 : f32 to vector<6x6xf32>
    %93 = arith.mulf %92, %81 : vector<6x6xf32>
    %94 = arith.mulf %93, %82 : vector<6x6xf32>
    %cst_45 = arith.constant 6.502500e+00 : f32
    %95 = vector.broadcast %cst_45 : f32 to vector<6x6xf32>
    %96 = arith.addf %94, %95 : vector<6x6xf32>
    %cst_46 = arith.constant 2.000000e+00 : f32
    %97 = vector.broadcast %cst_46 : f32 to vector<6x6xf32>
    %98 = arith.mulf %97, %91 : vector<6x6xf32>
    %cst_47 = arith.constant 5.852250e+01 : f32
    %99 = vector.broadcast %cst_47 : f32 to vector<6x6xf32>
    %100 = arith.addf %98, %99 : vector<6x6xf32>
    %101 = arith.mulf %96, %100 : vector<6x6xf32>
    %102 = arith.mulf %81, %81 : vector<6x6xf32>
    %103 = arith.mulf %82, %82 : vector<6x6xf32>
    %104 = arith.addf %102, %103 : vector<6x6xf32>
    %cst_48 = arith.constant 6.502500e+00 : f32
    %105 = vector.broadcast %cst_48 : f32 to vector<6x6xf32>
    %106 = arith.addf %104, %105 : vector<6x6xf32>
    %107 = arith.addf %85, %88 : vector<6x6xf32>
    %cst_49 = arith.constant 5.852250e+01 : f32
    %108 = vector.broadcast %cst_49 : f32 to vector<6x6xf32>
    %109 = arith.addf %107, %108 : vector<6x6xf32>
    %110 = arith.mulf %106, %109 : vector<6x6xf32>
    %111 = arith.divf %101, %110 : vector<6x6xf32>
    %112 = vector.shape_cast %111 : vector<6x6xf32> to vector<1x6x6xf32>
    %cst_50 = arith.constant dense<0.000000e+00> : vector<1xf32>
    %113 = vector.multi_reduction <add>, %112, %cst_50 [1, 2] : vector<1x6x6xf32> to vector<1xf32>
    %114 = vector.shape_cast %113 : vector<1xf32> to vector<1x1x1xf32>
    %115 = vector.extract %114[0, 0, 0] : f32 from vector<1x1x1xf32>
    %116 = vector.broadcast %115 : f32 to vector<1x1xf32>
    %cst_51 = arith.constant 3.600000e+01 : f32
    %117 = vector.broadcast %cst_51 : f32 to vector<1x1xf32>
    %118 = arith.divf %116, %117 : vector<1x1xf32>
    %119 = vector.shape_cast %118 : vector<1x1xf32> to vector<1x1x1xf32>
    %120 = vector.broadcast %119 : vector<1x1x1xf32> to vector<1x1x128xf32>
    %121 = arith.mulf %120, %0 : vector<1x1x128xf32>
    %c0_52 = arith.constant 0 : index
    %c0_53 = arith.constant 0 : index
    %c0_54 = arith.constant 0 : index
    %122 = vector.load %arg13[%c0_52, %c0_53, %c0_54] : memref<1x1x128xf32, #tpu.memory_space<vmem>>, vector<1x1x128xf32>
    tpu.vector_store %arg13[%c0_52, %c0_53, %c0_54], %121 {strides = array<i32>} : memref<1x1x128xf32, #tpu.memory_space<vmem>>, vector<1x1x128xf32>,
    %123 = tpu.concatenate %2, %4, %6 in 1 : vector<16x16xf32>, vector<16x16xf32>, vector<16x16xf32> -> vector<16x48xf32>
    %124 = tpu.concatenate %8, %10, %12 in 1 : vector<16x16xf32>, vector<16x16xf32>, vector<16x16xf32> -> vector<16x48xf32>
    %125 = tpu.concatenate %123, %124 in 0 : vector<16x48xf32>, vector<16x48xf32> -> vector<32x48xf32>
    %c0_55 = arith.constant 0 : index
    %c0_56 = arith.constant 0 : index
    %126 = vector.load %arg5[%c0_55, %c0_56] : memref<32x96xf32, #tpu.memory_space<vmem>>, vector<32x96xf32>
    %c0_57 = arith.constant 0 : index
    %c0_58 = arith.constant 0 : index
    %127 = vector.load %arg6[%c0_57, %c0_58] : memref<48x384xf32, #tpu.memory_space<vmem>>, vector<48x384xf32>
    %c0_59 = arith.constant 0 : index
    %c0_60 = arith.constant 0 : index
    %128 = vector.load %arg7[%c0_59, %c0_60] : memref<1x128xf32, #tpu.memory_space<vmem>>, vector<1x128xf32>
    %cst_61 = arith.constant dense<0.000000e+00> : vector<32x384xf32>
    %129 = tpu.matmul %125, %127, %cst_61 {dimension_numbers = #tpu.dot_dimension_numbers<[1], [0], [0], [1], [0, 0, 1, 1], [], []>} : vector<32x48xf32>, vector<48x384xf32>, vector<32x384xf32> -> vector<32x384xf32>
    %130 = vector.extract_strided_slice %129 {offsets = [0, 0], sizes = [32, 128], strides = [1, 1]} : vector<32x384xf32> to vector<32x128xf32>
    %131 = vector.extract_strided_slice %129 {offsets = [0, 128], sizes = [32, 128], strides = [1, 1]} : vector<32x384xf32> to vector<32x128xf32>
    %132 = vector.extract_strided_slice %129 {offsets = [0, 256], sizes = [32, 128], strides = [1, 1]} : vector<32x384xf32> to vector<32x128xf32>
    %133 = tpu.concatenate %130, %131, %132 in 0 : vector<32x128xf32>, vector<32x128xf32>, vector<32x128xf32> -> vector<96x128xf32>
    %cst_62 = arith.constant dense<0.000000e+00> : vector<32x128xf32>
    %134 = tpu.matmul %126, %133, %cst_62 {dimension_numbers = #tpu.dot_dimension_numbers<[1], [0], [0], [1], [0, 0, 1, 1], [], []>} : vector<32x96xf32>, vector<96x128xf32>, vector<32x128xf32> -> vector<32x128xf32>
    %135 = vector.broadcast %128 : vector<1x128xf32> to vector<32x128xf32>
    %136 = arith.addf %134, %135 : vector<32x128xf32>
    %cst_63 = arith.constant 0.000000e+00 : f32
    %137 = vector.broadcast %cst_63 : f32 to vector<32x128xf32>
    %138 = arith.maximumf %136, %137 : vector<32x128xf32>
    %c0_64 = arith.constant 0 : index
    %c0_65 = arith.constant 0 : index
    %139 = vector.load %arg8[%c0_64, %c0_65] : memref<128x768xf32, #tpu.memory_space<vmem>>, vector<128x768xf32>
    %c0_66 = arith.constant 0 : index
    %c0_67 = arith.constant 0 : index
    %140 = vector.load %arg9[%c0_66, %c0_67] : memref<1x256xf32, #tpu.memory_space<vmem>>, vector<1x256xf32>
    %cst_68 = arith.constant dense<0.000000e+00> : vector<32x768xf32>
    %141 = tpu.matmul %138, %139, %cst_68 {dimension_numbers = #tpu.dot_dimension_numbers<[1], [0], [0], [1], [0, 0, 1, 1], [], []>} : vector<32x128xf32>, vector<128x768xf32>, vector<32x768xf32> -> vector<32x768xf32>
    %142 = vector.extract_strided_slice %141 {offsets = [0, 0], sizes = [32, 256], strides = [1, 1]} : vector<32x768xf32> to vector<32x256xf32>
    %143 = vector.extract_strided_slice %141 {offsets = [0, 256], sizes = [32, 256], strides = [1, 1]} : vector<32x768xf32> to vector<32x256xf32>
    %144 = vector.extract_strided_slice %141 {offsets = [0, 512], sizes = [32, 256], strides = [1, 1]} : vector<32x768xf32> to vector<32x256xf32>
    %145 = tpu.concatenate %142, %143, %144 in 0 : vector<32x256xf32>, vector<32x256xf32>, vector<32x256xf32> -> vector<96x256xf32>
    %cst_69 = arith.constant dense<0.000000e+00> : vector<32x256xf32>
    %146 = tpu.matmul %126, %145, %cst_69 {dimension_numbers = #tpu.dot_dimension_numbers<[1], [0], [0], [1], [0, 0, 1, 1], [], []>} : vector<32x96xf32>, vector<96x256xf32>, vector<32x256xf32> -> vector<32x256xf32>
    %147 = vector.broadcast %140 : vector<1x256xf32> to vector<32x256xf32>
    %148 = arith.addf %146, %147 : vector<32x256xf32>
    %cst_70 = arith.constant 0.000000e+00 : f32
    %149 = vector.broadcast %cst_70 : f32 to vector<32x256xf32>
    %150 = arith.maximumf %148, %149 : vector<32x256xf32>
    %c0_71 = arith.constant 0 : index
    %c0_72 = arith.constant 0 : index
    %151 = vector.load %arg10[%c0_71, %c0_72] : memref<1x128xf32, #tpu.memory_space<vmem>>, vector<1x128xf32>
    %152 = vector.extract_strided_slice %138 {offsets = [0, 0], sizes = [16, 128], strides = [1, 1]} : vector<32x128xf32> to vector<16x128xf32>
    %153 = vector.extract_strided_slice %138 {offsets = [16, 0], sizes = [16, 128], strides = [1, 1]} : vector<32x128xf32> to vector<16x128xf32>
    %cst_73 = arith.constant 0.000000e+00 : f32
    %154 = vector.broadcast %cst_73 : f32 to vector<16x16xf32>
    %cst_74 = arith.constant 0.000000e+00 : f32
    %155 = vector.broadcast %cst_74 : f32 to vector<16x16xf32>
    %156 = vector.extract_strided_slice %152 {offsets = [0, 0], sizes = [16, 16], strides = [1, 1]} : vector<16x128xf32> to vector<16x16xf32>
    %157 = vector.extract_strided_slice %153 {offsets = [0, 0], sizes = [16, 16], strides = [1, 1]} : vector<16x128xf32> to vector<16x16xf32>
    %158 = arith.mulf %156, %156 : vector<16x16xf32>
    %159 = arith.addf %154, %158 : vector<16x16xf32>
    %160 = arith.mulf %157, %157 : vector<16x16xf32>
    %161 = arith.addf %155, %160 : vector<16x16xf32>
    %162 = vector.extract_strided_slice %152 {offsets = [0, 16], sizes = [16, 16], strides = [1, 1]} : vector<16x128xf32> to vector<16x16xf32>
    %163 = vector.extract_strided_slice %153 {offsets = [0, 16], sizes = [16, 16], strides = [1, 1]} : vector<16x128xf32> to vector<16x16xf32>
    %164 = arith.mulf %162, %162 : vector<16x16xf32>
    %165 = arith.addf %159, %164 : vector<16x16xf32>
    %166 = arith.mulf %163, %163 : vector<16x16xf32>
    %167 = arith.addf %161, %166 : vector<16x16xf32>
    %168 = vector.extract_strided_slice %152 {offsets = [0, 32], sizes = [16, 16], strides = [1, 1]} : vector<16x128xf32> to vector<16x16xf32>
    %169 = vector.extract_strided_slice %153 {offsets = [0, 32], sizes = [16, 16], strides = [1, 1]} : vector<16x128xf32> to vector<16x16xf32>
    %170 = arith.mulf %168, %168 : vector<16x16xf32>
    %171 = arith.addf %165, %170 : vector<16x16xf32>
    %172 = arith.mulf %169, %169 : vector<16x16xf32>
    %173 = arith.addf %167, %172 : vector<16x16xf32>
    %174 = vector.extract_strided_slice %152 {offsets = [0, 48], sizes = [16, 16], strides = [1, 1]} : vector<16x128xf32> to vector<16x16xf32>
    %175 = vector.extract_strided_slice %153 {offsets = [0, 48], sizes = [16, 16], strides = [1, 1]} : vector<16x128xf32> to vector<16x16xf32>
    %176 = arith.mulf %174, %174 : vector<16x16xf32>
    %177 = arith.addf %171, %176 : vector<16x16xf32>
    %178 = arith.mulf %175, %175 : vector<16x16xf32>
    %179 = arith.addf %173, %178 : vector<16x16xf32>
    %180 = vector.extract_strided_slice %152 {offsets = [0, 64], sizes = [16, 16], strides = [1, 1]} : vector<16x128xf32> to vector<16x16xf32>
    %181 = vector.extract_strided_slice %153 {offsets = [0, 64], sizes = [16, 16], strides = [1, 1]} : vector<16x128xf32> to vector<16x16xf32>
    %182 = arith.mulf %180, %180 : vector<16x16xf32>
    %183 = arith.addf %177, %182 : vector<16x16xf32>
    %184 = arith.mulf %181, %181 : vector<16x16xf32>
    %185 = arith.addf %179, %184 : vector<16x16xf32>
    %186 = vector.extract_strided_slice %152 {offsets = [0, 80], sizes = [16, 16], strides = [1, 1]} : vector<16x128xf32> to vector<16x16xf32>
    %187 = vector.extract_strided_slice %153 {offsets = [0, 80], sizes = [16, 16], strides = [1, 1]} : vector<16x128xf32> to vector<16x16xf32>
    %188 = arith.mulf %186, %186 : vector<16x16xf32>
    %189 = arith.addf %183, %188 : vector<16x16xf32>
    %190 = arith.mulf %187, %187 : vector<16x16xf32>
    %191 = arith.addf %185, %190 : vector<16x16xf32>
    %192 = vector.extract_strided_slice %152 {offsets = [0, 96], sizes = [16, 16], strides = [1, 1]} : vector<16x128xf32> to vector<16x16xf32>
    %193 = vector.extract_strided_slice %153 {offsets = [0, 96], sizes = [16, 16], strides = [1, 1]} : vector<16x128xf32> to vector<16x16xf32>
    %194 = arith.mulf %192, %192 : vector<16x16xf32>
    %195 = arith.addf %189, %194 : vector<16x16xf32>
    %196 = arith.mulf %193, %193 : vector<16x16xf32>
    %197 = arith.addf %191, %196 : vector<16x16xf32>
    %198 = vector.extract_strided_slice %152 {offsets = [0, 112], sizes = [16, 16], strides = [1, 1]} : vector<16x128xf32> to vector<16x16xf32>
    %199 = vector.extract_strided_slice %153 {offsets = [0, 112], sizes = [16, 16], strides = [1, 1]} : vector<16x128xf32> to vector<16x16xf32>
    %200 = arith.mulf %198, %198 : vector<16x16xf32>
    %201 = arith.addf %195, %200 : vector<16x16xf32>
    %202 = arith.mulf %199, %199 : vector<16x16xf32>
    %203 = arith.addf %197, %202 : vector<16x16xf32>
    %cst_75 = arith.constant 1.000000e-10 : f32
    %204 = vector.broadcast %cst_75 : f32 to vector<16x16xf32>
    %205 = arith.addf %201, %204 : vector<16x16xf32>
    %206 = math.rsqrt %205 : vector<16x16xf32>
    %207 = tpu.concatenate %206, %206, %206, %206, %206, %206, %206, %206 in 1 : vector<16x16xf32>, vector<16x16xf32>, vector<16x16xf32>, vector<16x16xf32>, vector<16x16xf32>, vector<16x16xf32>, vector<16x16xf32>, vector<16x16xf32> -> vector<16x128xf32>
    %cst_76 = arith.constant 1.000000e-10 : f32
    %208 = vector.broadcast %cst_76 : f32 to vector<16x16xf32>
    %209 = arith.addf %203, %208 : vector<16x16xf32>
    %210 = math.rsqrt %209 : vector<16x16xf32>
    %211 = tpu.concatenate %210, %210, %210, %210, %210, %210, %210, %210 in 1 : vector<16x16xf32>, vector<16x16xf32>, vector<16x16xf32>, vector<16x16xf32>, vector<16x16xf32>, vector<16x16xf32>, vector<16x16xf32>, vector<16x16xf32> -> vector<16x128xf32>
    %212 = arith.mulf %152, %207 : vector<16x128xf32>
    %213 = arith.mulf %153, %211 : vector<16x128xf32>
    %214 = arith.subf %212, %213 : vector<16x128xf32>
    %215 = arith.mulf %214, %214 : vector<16x128xf32>
    %216 = vector.broadcast %151 : vector<1x128xf32> to vector<16x128xf32>
    %217 = arith.mulf %215, %216 : vector<16x128xf32>
    %218 = vector.shape_cast %217 : vector<16x128xf32> to vector<1x16x128xf32>
    %cst_77 = arith.constant dense<0.000000e+00> : vector<1xf32>
    %219 = vector.multi_reduction <add>, %218, %cst_77 [1, 2] : vector<1x16x128xf32> to vector<1xf32>
    %220 = vector.shape_cast %219 : vector<1xf32> to vector<1x1x1xf32>
    %221 = vector.extract %220[0, 0, 0] : f32 from vector<1x1x1xf32>
    %222 = vector.broadcast %221 : f32 to vector<1x1xf32>
    %cst_78 = arith.constant 3.906250e-03 : f32
    %223 = vector.broadcast %cst_78 : f32 to vector<1x1xf32>
    %224 = arith.mulf %222, %223 : vector<1x1xf32>
    %c0_79 = arith.constant 0 : index
    %c0_80 = arith.constant 0 : index
    %225 = vector.load %arg11[%c0_79, %c0_80] : memref<1x256xf32, #tpu.memory_space<vmem>>, vector<1x256xf32>
    %226 = vector.extract_strided_slice %150 {offsets = [0, 0], sizes = [16, 256], strides = [1, 1]} : vector<32x256xf32> to vector<16x256xf32>
    %227 = vector.extract_strided_slice %150 {offsets = [16, 0], sizes = [16, 256], strides = [1, 1]} : vector<32x256xf32> to vector<16x256xf32>
    %cst_81 = arith.constant 0.000000e+00 : f32
    %228 = vector.broadcast %cst_81 : f32 to vector<16x16xf32>
    %cst_82 = arith.constant 0.000000e+00 : f32
    %229 = vector.broadcast %cst_82 : f32 to vector<16x16xf32>
    %230 = vector.extract_strided_slice %226 {offsets = [0, 0], sizes = [16, 16], strides = [1, 1]} : vector<16x256xf32> to vector<16x16xf32>
    %231 = vector.extract_strided_slice %227 {offsets = [0, 0], sizes = [16, 16], strides = [1, 1]} : vector<16x256xf32> to vector<16x16xf32>
    %232 = arith.mulf %230, %230 : vector<16x16xf32>
    %233 = arith.addf %228, %232 : vector<16x16xf32>
    %234 = arith.mulf %231, %231 : vector<16x16xf32>
    %235 = arith.addf %229, %234 : vector<16x16xf32>
    %236 = vector.extract_strided_slice %226 {offsets = [0, 16], sizes = [16, 16], strides = [1, 1]} : vector<16x256xf32> to vector<16x16xf32>
    %237 = vector.extract_strided_slice %227 {offsets = [0, 16], sizes = [16, 16], strides = [1, 1]} : vector<16x256xf32> to vector<16x16xf32>
    %238 = arith.mulf %236, %236 : vector<16x16xf32>
    %239 = arith.addf %233, %238 : vector<16x16xf32>
    %240 = arith.mulf %237, %237 : vector<16x16xf32>
    %241 = arith.addf %235, %240 : vector<16x16xf32>
    %242 = vector.extract_strided_slice %226 {offsets = [0, 32], sizes = [16, 16], strides = [1, 1]} : vector<16x256xf32> to vector<16x16xf32>
    %243 = vector.extract_strided_slice %227 {offsets = [0, 32], sizes = [16, 16], strides = [1, 1]} : vector<16x256xf32> to vector<16x16xf32>
    %244 = arith.mulf %242, %242 : vector<16x16xf32>
    %245 = arith.addf %239, %244 : vector<16x16xf32>
    %246 = arith.mulf %243, %243 : vector<16x16xf32>
    %247 = arith.addf %241, %246 : vector<16x16xf32>
    %248 = vector.extract_strided_slice %226 {offsets = [0, 48], sizes = [16, 16], strides = [1, 1]} : vector<16x256xf32> to vector<16x16xf32>
    %249 = vector.extract_strided_slice %227 {offsets = [0, 48], sizes = [16, 16], strides = [1, 1]} : vector<16x256xf32> to vector<16x16xf32>
    %250 = arith.mulf %248, %248 : vector<16x16xf32>
    %251 = arith.addf %245, %250 : vector<16x16xf32>
    %252 = arith.mulf %249, %249 : vector<16x16xf32>
    %253 = arith.addf %247, %252 : vector<16x16xf32>
    %254 = vector.extract_strided_slice %226 {offsets = [0, 64], sizes = [16, 16], strides = [1, 1]} : vector<16x256xf32> to vector<16x16xf32>
    %255 = vector.extract_strided_slice %227 {offsets = [0, 64], sizes = [16, 16], strides = [1, 1]} : vector<16x256xf32> to vector<16x16xf32>
    %256 = arith.mulf %254, %254 : vector<16x16xf32>
    %257 = arith.addf %251, %256 : vector<16x16xf32>
    %258 = arith.mulf %255, %255 : vector<16x16xf32>
    %259 = arith.addf %253, %258 : vector<16x16xf32>
    %260 = vector.extract_strided_slice %226 {offsets = [0, 80], sizes = [16, 16], strides = [1, 1]} : vector<16x256xf32> to vector<16x16xf32>
    %261 = vector.extract_strided_slice %227 {offsets = [0, 80], sizes = [16, 16], strides = [1, 1]} : vector<16x256xf32> to vector<16x16xf32>
    %262 = arith.mulf %260, %260 : vector<16x16xf32>
    %263 = arith.addf %257, %262 : vector<16x16xf32>
    %264 = arith.mulf %261, %261 : vector<16x16xf32>
    %265 = arith.addf %259, %264 : vector<16x16xf32>
    %266 = vector.extract_strided_slice %226 {offsets = [0, 96], sizes = [16, 16], strides = [1, 1]} : vector<16x256xf32> to vector<16x16xf32>
    %267 = vector.extract_strided_slice %227 {offsets = [0, 96], sizes = [16, 16], strides = [1, 1]} : vector<16x256xf32> to vector<16x16xf32>
    %268 = arith.mulf %266, %266 : vector<16x16xf32>
    %269 = arith.addf %263, %268 : vector<16x16xf32>
    %270 = arith.mulf %267, %267 : vector<16x16xf32>
    %271 = arith.addf %265, %270 : vector<16x16xf32>
    %272 = vector.extract_strided_slice %226 {offsets = [0, 112], sizes = [16, 16], strides = [1, 1]} : vector<16x256xf32> to vector<16x16xf32>
    %273 = vector.extract_strided_slice %227 {offsets = [0, 112], sizes = [16, 16], strides = [1, 1]} : vector<16x256xf32> to vector<16x16xf32>
    %274 = arith.mulf %272, %272 : vector<16x16xf32>
    %275 = arith.addf %269, %274 : vector<16x16xf32>
    %276 = arith.mulf %273, %273 : vector<16x16xf32>
    %277 = arith.addf %271, %276 : vector<16x16xf32>
    %278 = vector.extract_strided_slice %226 {offsets = [0, 128], sizes = [16, 16], strides = [1, 1]} : vector<16x256xf32> to vector<16x16xf32>
    %279 = vector.extract_strided_slice %227 {offsets = [0, 128], sizes = [16, 16], strides = [1, 1]} : vector<16x256xf32> to vector<16x16xf32>
    %280 = arith.mulf %278, %278 : vector<16x16xf32>
    %281 = arith.addf %275, %280 : vector<16x16xf32>
    %282 = arith.mulf %279, %279 : vector<16x16xf32>
    %283 = arith.addf %277, %282 : vector<16x16xf32>
    %284 = vector.extract_strided_slice %226 {offsets = [0, 144], sizes = [16, 16], strides = [1, 1]} : vector<16x256xf32> to vector<16x16xf32>
    %285 = vector.extract_strided_slice %227 {offsets = [0, 144], sizes = [16, 16], strides = [1, 1]} : vector<16x256xf32> to vector<16x16xf32>
    %286 = arith.mulf %284, %284 : vector<16x16xf32>
    %287 = arith.addf %281, %286 : vector<16x16xf32>
    %288 = arith.mulf %285, %285 : vector<16x16xf32>
    %289 = arith.addf %283, %288 : vector<16x16xf32>
    %290 = vector.extract_strided_slice %226 {offsets = [0, 160], sizes = [16, 16], strides = [1, 1]} : vector<16x256xf32> to vector<16x16xf32>
    %291 = vector.extract_strided_slice %227 {offsets = [0, 160], sizes = [16, 16], strides = [1, 1]} : vector<16x256xf32> to vector<16x16xf32>
    %292 = arith.mulf %290, %290 : vector<16x16xf32>
    %293 = arith.addf %287, %292 : vector<16x16xf32>
    %294 = arith.mulf %291, %291 : vector<16x16xf32>
    %295 = arith.addf %289, %294 : vector<16x16xf32>
    %296 = vector.extract_strided_slice %226 {offsets = [0, 176], sizes = [16, 16], strides = [1, 1]} : vector<16x256xf32> to vector<16x16xf32>
    %297 = vector.extract_strided_slice %227 {offsets = [0, 176], sizes = [16, 16], strides = [1, 1]} : vector<16x256xf32> to vector<16x16xf32>
    %298 = arith.mulf %296, %296 : vector<16x16xf32>
    %299 = arith.addf %293, %298 : vector<16x16xf32>
    %300 = arith.mulf %297, %297 : vector<16x16xf32>
    %301 = arith.addf %295, %300 : vector<16x16xf32>
    %302 = vector.extract_strided_slice %226 {offsets = [0, 192], sizes = [16, 16], strides = [1, 1]} : vector<16x256xf32> to vector<16x16xf32>
    %303 = vector.extract_strided_slice %227 {offsets = [0, 192], sizes = [16, 16], strides = [1, 1]} : vector<16x256xf32> to vector<16x16xf32>
    %304 = arith.mulf %302, %302 : vector<16x16xf32>
    %305 = arith.addf %299, %304 : vector<16x16xf32>
    %306 = arith.mulf %303, %303 : vector<16x16xf32>
    %307 = arith.addf %301, %306 : vector<16x16xf32>
    %308 = vector.extract_strided_slice %226 {offsets = [0, 208], sizes = [16, 16], strides = [1, 1]} : vector<16x256xf32> to vector<16x16xf32>
    %309 = vector.extract_strided_slice %227 {offsets = [0, 208], sizes = [16, 16], strides = [1, 1]} : vector<16x256xf32> to vector<16x16xf32>
    %310 = arith.mulf %308, %308 : vector<16x16xf32>
    %311 = arith.addf %305, %310 : vector<16x16xf32>
    %312 = arith.mulf %309, %309 : vector<16x16xf32>
    %313 = arith.addf %307, %312 : vector<16x16xf32>
    %314 = vector.extract_strided_slice %226 {offsets = [0, 224], sizes = [16, 16], strides = [1, 1]} : vector<16x256xf32> to vector<16x16xf32>
    %315 = vector.extract_strided_slice %227 {offsets = [0, 224], sizes = [16, 16], strides = [1, 1]} : vector<16x256xf32> to vector<16x16xf32>
    %316 = arith.mulf %314, %314 : vector<16x16xf32>
    %317 = arith.addf %311, %316 : vector<16x16xf32>
    %318 = arith.mulf %315, %315 : vector<16x16xf32>
    %319 = arith.addf %313, %318 : vector<16x16xf32>
    %320 = vector.extract_strided_slice %226 {offsets = [0, 240], sizes = [16, 16], strides = [1, 1]} : vector<16x256xf32> to vector<16x16xf32>
    %321 = vector.extract_strided_slice %227 {offsets = [0, 240], sizes = [16, 16], strides = [1, 1]} : vector<16x256xf32> to vector<16x16xf32>
    %322 = arith.mulf %320, %320 : vector<16x16xf32>
    %323 = arith.addf %317, %322 : vector<16x16xf32>
    %324 = arith.mulf %321, %321 : vector<16x16xf32>
    %325 = arith.addf %319, %324 : vector<16x16xf32>
    %cst_83 = arith.constant 1.000000e-10 : f32
    %326 = vector.broadcast %cst_83 : f32 to vector<16x16xf32>
    %327 = arith.addf %323, %326 : vector<16x16xf32>
    %328 = math.rsqrt %327 : vector<16x16xf32>
    %329 = tpu.concatenate %328, %328, %328, %328, %328, %328, %328, %328, %328, %328, %328, %328, %328, %328, %328, %328 in 1 : vector<16x16xf32>, vector<16x16xf32>, vector<16x16xf32>, vector<16x16xf32>, vector<16x16xf32>, vector<16x16xf32>, vector<16x16xf32>, vector<16x16xf32>, vector<16x16xf32>, vector<16x16xf32>, vector<16x16xf32>, vector<16x16xf32>, vector<16x16xf32>, vector<16x16xf32>, vector<16x16xf32>, vector<16x16xf32> -> vector<16x256xf32>
    %cst_84 = arith.constant 1.000000e-10 : f32
    %330 = vector.broadcast %cst_84 : f32 to vector<16x16xf32>
    %331 = arith.addf %325, %330 : vector<16x16xf32>
    %332 = math.rsqrt %331 : vector<16x16xf32>
    %333 = tpu.concatenate %332, %332, %332, %332, %332, %332, %332, %332, %332, %332, %332, %332, %332, %332, %332, %332 in 1 : vector<16x16xf32>, vector<16x16xf32>, vector<16x16xf32>, vector<16x16xf32>, vector<16x16xf32>, vector<16x16xf32>, vector<16x16xf32>, vector<16x16xf32>, vector<16x16xf32>, vector<16x16xf32>, vector<16x16xf32>, vector<16x16xf32>, vector<16x16xf32>, vector<16x16xf32>, vector<16x16xf32>, vector<16x16xf32> -> vector<16x256xf32>
    %334 = arith.mulf %226, %329 : vector<16x256xf32>
    %335 = arith.mulf %227, %333 : vector<16x256xf32>
    %336 = arith.subf %334, %335 : vector<16x256xf32>
    %337 = arith.mulf %336, %336 : vector<16x256xf32>
    %338 = vector.broadcast %225 : vector<1x256xf32> to vector<16x256xf32>
    %339 = arith.mulf %337, %338 : vector<16x256xf32>
    %340 = vector.shape_cast %339 : vector<16x256xf32> to vector<1x16x256xf32>
    %cst_85 = arith.constant dense<0.000000e+00> : vector<1xf32>
    %341 = vector.multi_reduction <add>, %340, %cst_85 [1, 2] : vector<1x16x256xf32> to vector<1xf32>
    %342 = vector.shape_cast %341 : vector<1xf32> to vector<1x1x1xf32>
    %343 = vector.extract %342[0, 0, 0] : f32 from vector<1x1x1xf32>
    %344 = vector.broadcast %343 : f32 to vector<1x1xf32>
    %cst_86 = arith.constant 3.906250e-03 : f32
    %345 = vector.broadcast %cst_86 : f32 to vector<1x1xf32>
    %346 = arith.mulf %344, %345 : vector<1x1xf32>
    %347 = arith.addf %224, %346 : vector<1x1xf32>
    %348 = vector.shape_cast %347 : vector<1x1xf32> to vector<1x1x1xf32>
    %349 = vector.broadcast %348 : vector<1x1x1xf32> to vector<1x1x128xf32>
    %350 = arith.mulf %349, %0 : vector<1x1x128xf32>
    %c0_87 = arith.constant 0 : index
    %c0_88 = arith.constant 0 : index
    %c0_89 = arith.constant 0 : index
    %351 = vector.load %arg14[%c0_87, %c0_88, %c0_89] : memref<1x1x128xf32, #tpu.memory_space<vmem>>, vector<1x1x128xf32>
    tpu.vector_store %arg14[%c0_87, %c0_88, %c0_89], %350 {strides = array<i32>} : memref<1x1x128xf32, #tpu.memory_space<vmem>>, vector<1x1x128xf32>,
    return
  }
  func.func @transform_0(%arg0: i32) -> (i32, i32, i32, i32) {
    %c0_i32 = arith.constant 0 : i32
    %c0_i32_0 = arith.constant 0 : i32
    %c0_i32_1 = arith.constant 0 : i32
    %c0_i32_2 = arith.constant 0 : i32
    return %arg0, %c0_i32, %c0_i32_0, %c0_i32_1 : i32, i32, i32, i32
  }
  func.func @transform_1(%arg0: i32) -> (i32, i32, i32, i32) {
    %c0_i32 = arith.constant 0 : i32
    %c0_i32_0 = arith.constant 0 : i32
    %c0_i32_1 = arith.constant 0 : i32
    %c0_i32_2 = arith.constant 0 : i32
    return %arg0, %c0_i32, %c0_i32_0, %c0_i32_1 : i32, i32, i32, i32
  }
  func.func @transform_2(%arg0: i32) -> (i32, i32) {
    %c0_i32 = arith.constant 0 : i32
    %c0_i32_0 = arith.constant 0 : i32
    %c0_i32_1 = arith.constant 0 : i32
    return %c0_i32, %c0_i32_0 : i32, i32
  }
  func.func @transform_3(%arg0: i32) -> (i32, i32) {
    %c0_i32 = arith.constant 0 : i32
    %c0_i32_0 = arith.constant 0 : i32
    %c0_i32_1 = arith.constant 0 : i32
    return %c0_i32, %c0_i32_0 : i32, i32
  }
  func.func @transform_4(%arg0: i32) -> (i32, i32) {
    %c0_i32 = arith.constant 0 : i32
    %c0_i32_0 = arith.constant 0 : i32
    %c0_i32_1 = arith.constant 0 : i32
    return %c0_i32, %c0_i32_0 : i32, i32
  }
  func.func @transform_5(%arg0: i32) -> (i32, i32) {
    %c0_i32 = arith.constant 0 : i32
    %c0_i32_0 = arith.constant 0 : i32
    %c0_i32_1 = arith.constant 0 : i32
    return %c0_i32, %c0_i32_0 : i32, i32
  }
  func.func @transform_6(%arg0: i32) -> (i32, i32) {
    %c0_i32 = arith.constant 0 : i32
    %c0_i32_0 = arith.constant 0 : i32
    %c0_i32_1 = arith.constant 0 : i32
    return %c0_i32, %c0_i32_0 : i32, i32
  }
  func.func @transform_7(%arg0: i32) -> (i32, i32) {
    %c0_i32 = arith.constant 0 : i32
    %c0_i32_0 = arith.constant 0 : i32
    %c0_i32_1 = arith.constant 0 : i32
    return %c0_i32, %c0_i32_0 : i32, i32
  }
  func.func @transform_8(%arg0: i32) -> (i32, i32) {
    %c0_i32 = arith.constant 0 : i32
    %c0_i32_0 = arith.constant 0 : i32
    %c0_i32_1 = arith.constant 0 : i32
    return %c0_i32, %c0_i32_0 : i32, i32
  }
  func.func @transform_9(%arg0: i32) -> (i32, i32) {
    %c0_i32 = arith.constant 0 : i32
    %c0_i32_0 = arith.constant 0 : i32
    %c0_i32_1 = arith.constant 0 : i32
    return %c0_i32, %c0_i32_0 : i32, i32
  }
  func.func @transform_10(%arg0: i32) -> (i32, i32) {
    %c0_i32 = arith.constant 0 : i32
    %c0_i32_0 = arith.constant 0 : i32
    %c0_i32_1 = arith.constant 0 : i32
    return %c0_i32, %c0_i32_0 : i32, i32
  }
  func.func @transform_11(%arg0: i32) -> (i32, i32, i32) {
    %c0_i32 = arith.constant 0 : i32
    %c0_i32_0 = arith.constant 0 : i32
    %c0_i32_1 = arith.constant 0 : i32
    return %arg0, %c0_i32, %c0_i32_0 : i32, i32, i32
  }
  func.func @transform_12(%arg0: i32) -> (i32, i32, i32) {
    %c0_i32 = arith.constant 0 : i32
    %c0_i32_0 = arith.constant 0 : i32
    %c0_i32_1 = arith.constant 0 : i32
    return %arg0, %c0_i32, %c0_i32_0 : i32, i32, i32
  }
  func.func @transform_13(%arg0: i32) -> (i32, i32, i32) {
    %c0_i32 = arith.constant 0 : i32
    %c0_i32_0 = arith.constant 0 : i32
    %c0_i32_1 = arith.constant 0 : i32
    return %arg0, %c0_i32, %c0_i32_0 : i32, i32, i32
  }
}

</mosaic_0001>

<llo_original>
// kernel: fn.1
$region0: #{fn.1}
  #allocation0 [shape = 'u32[]', space=smem, size = 0x4, offset = 0x4, fixed_abs, tag = 'smem constant byte address 0x4 - core index']
  #allocation1 [shape = 'u32[72,128]{1,0:T(1,128)}', space=vmem, size = 0x9000, scoped, tag = 'internal scratch']
  %s0 = inlined_call_operand.hbm [shape: f32[2,3,16,16], index: 0, kind: input, shape index: {}]
  %s1 = inlined_call_operand.hbm [shape: f32[2,3,16,16], index: 1, kind: input, shape index: {}]
  %s2 = inlined_call_operand.vmem [shape: f32[6,16], index: 2, kind: input, shape index: {}]
  %s3 = inlined_call_operand.hbm [shape: f32[16,6], index: 3, kind: input, shape index: {}]
  %s4 = inlined_call_operand.hbm [shape: f32[32,96], index: 4, kind: input, shape index: {}]
  %s5 = inlined_call_operand.hbm [shape: f32[48,384], index: 5, kind: input, shape index: {}]
  %s6 = inlined_call_operand.vmem [shape: f32[1,128], index: 6, kind: input, shape index: {}]
  %s7 = inlined_call_operand.hbm [shape: f32[128,768], index: 7, kind: input, shape index: {}]
  %s8 = inlined_call_operand.vmem [shape: f32[1,256], index: 8, kind: input, shape index: {}]
  %s9 = inlined_call_operand.vmem [shape: f32[1,128], index: 9, kind: input, shape index: {}]
  %s10 = inlined_call_operand.vmem [shape: f32[1,256], index: 10, kind: input, shape index: {}]
  %s11 = inlined_call_operand.vmem [shape: f32[2,1,128], index: 11, kind: output, shape index: {0}]
  %s12 = inlined_call_operand.vmem [shape: f32[2,1,128], index: 12, kind: output, shape index: {1}]
  %s13 = inlined_call_operand.vmem [shape: f32[2,1,128], index: 13, kind: output, shape index: {2}]
  %14 = xla_tuple %s11, %s12, %s13
  %s15 = sld [smem:[#allocation0]]
  $region117: #{fn.1} parent=0
    _
  %s17 = ssub.s32 1, %s15
  %s18 = scalar_select 0, %s17, %s15
  $region1: #{fn.1} parent=0
    #allocation2 [shape = 'u8[49152]{0}', space=vmem, size = 0xc000, scoped, tag = 'input window, operand 0']
    #allocation3 [shape = 's32[2]{0}', space=sflag, size = 0x8, scoped, tag = 'scoped memory for fn.1']
    #allocation4 [shape = 'u8[49152]{0}', space=vmem, size = 0xc000, scoped, tag = 'input window, operand 1']
    #allocation5 [shape = 's32[2]{0}', space=sflag, size = 0x8, scoped, tag = 'scoped memory for fn.1']
    #allocation6 [shape = 'u8[8192]{0}', space=vmem, size = 0x2000, scoped, tag = 'input window, operand 3, single buffered']
    #allocation7 [shape = 'u8[16384]{0}', space=vmem, size = 0x4000, scoped, tag = 'input window, operand 4, single buffered']
    #allocation8 [shape = 's32[1]{0}', space=sflag, size = 0x4, scoped, tag = 'scoped memory for fn.1']
    #allocation9 [shape = 'u8[73728]{0}', space=vmem, size = 0x12000, scoped, tag = 'input window, operand 5, single buffered']
    #allocation10 [shape = 'u8[393216]{0}', space=vmem, size = 0x60000, scoped, tag = 'input window, operand 7, single buffered']
    #allocation11 [shape = 's32[1]{0}', space=sflag, size = 0x4, scoped, tag = 'scoped memory for fn.1']
    %19 = vsyncpa [#allocation3], 0
    %s20 = scalar_lea.sflag [#allocation3], 1
    %21 = vsyncpa %s20, 0
    %22 = vsyncpa [#allocation5], 0
    %s23 = scalar_lea.sflag [#allocation5], 1
    %24 = vsyncpa %s23, 0
    %25 = vsyncpa [#allocation8], 0
    %26 = vsyncpa [#allocation11], 0
    loop: start=0, step=1, limit=4
    $region2: #{fn.1} parent=1 // loop_pre_header
      _
    $region3: #{fn.1} parent=1 // loop_header
      %s28 = sphi 0, %s32
      %p29 = scmp.ge.s32.totalorder %s28, 4
      %s38 = sphi 0, %s40
      %s41 = sphi 0, %s38
      %s42 = sphi 0, %s41
      %s58 = sphi 0, %s42
      %s64 = sphi 0, %s66
      %s67 = sphi 0, %s64
      %s68 = sphi 0, %s67
      %s84 = sphi 0, %s68
      %s88 = sphi 0, %s88
      %s90 = sphi 0, %s88
      %s91 = sphi 0, %s90
      %s105 = sphi 0, %s91
      %s109 = sphi 0, %s109
      %s111 = sphi 0, %s109
      %s112 = sphi 0, %s111
      %s126 = sphi 0, %s112
      %s130 = sphi 0, %s130
      %s132 = sphi 0, %s130
      %s133 = sphi 0, %s132
      %s147 = sphi 0, %s133
      %s151 = sphi 0, %s151
      %s153 = sphi 0, %s151
      %s154 = sphi 0, %s153
      %s168 = sphi 0, %s154
      %s172 = sphi 0, %s172
      %s174 = sphi 0, %s172
      %s175 = sphi 0, %s174
      %s189 = sphi 0, %s175
      %s193 = sphi 0, %s193
      %s195 = sphi 0, %s193
      %s196 = sphi 0, %s195
      %s210 = sphi 0, %s196
      %s214 = sphi 0, %s214
      %s216 = sphi 0, %s214
      %s217 = sphi 0, %s216
      %s231 = sphi 0, %s217
      %s235 = sphi 0, %s235
      %s237 = sphi 0, %s235
      %s238 = sphi 0, %s237
      %s252 = sphi 0, %s238
      %s256 = sphi 0, %s256
      %s258 = sphi 0, %s256
      %s259 = sphi 0, %s258
      %s273 = sphi 0, %s259
      %s279 = sphi 0, %s281
      %s282 = sphi 0, %s279
      %s283 = sphi 0, %s282
      %s299 = sphi 0, %s283
      %s305 = sphi 0, %s307
      %s308 = sphi 0, %s305
      %s309 = sphi 0, %s308
      %s325 = sphi 0, %s309
      %s331 = sphi 0, %s333
      %s334 = sphi 0, %s331
      %s335 = sphi 0, %s334
      %s351 = sphi 0, %s335
    $region4: #{fn.1} parent=1 // loop_header_branch
      %31 = sbr.rel (%p29) target = $region8
    $region5: #{fn.1} parent=1 // loop_body
      %s33 = ssub.s32 %s28, 1
      %s34 = ssub.s32 %s28, 2
      %s35 = sadd.s32 %s28, 1
      %s36 = ssub.s32 %s28, %s35
      %p37 = scmp.eq.s32.totalorder %s36, 0
      %s39 = sadd.s32 %s38, 1
      %s40 = scalar_select %p37, %s38, %s39
      %p43 = pneg %p37
      %p44 = scmp.eq.s32.totalorder %s28, 1
      %p45 = por %p43, %p44
      %p46 = scmp.ne.s32.totalorder %s38, %s41
      %p47 = scmp.eq.s32.totalorder %s28, 0
      %p48 = por %p46, %p47
      %p49 = scmp.ne.s32.totalorder %s38, %s41
      %p50 = scmp.eq.s32.totalorder %s33, 1
      %p51 = por %p49, %p50
      %p52 = scmp.ne.s32.totalorder %s41, %s42
      %p53 = scmp.eq.s32.totalorder %s33, 0
      %p54 = por %p52, %p53
      %p55 = scmp.ne.s32.totalorder %s41, %s42
      %p56 = scmp.eq.s32.totalorder %s34, 1
      %p57 = por %p55, %p56
      %p59 = scmp.ne.s32.totalorder %s42, %s58
      %p60 = scmp.eq.s32.totalorder %s34, 0
      %p61 = por %p59, %p60
      %s62 = ssub.s32 %s28, %s35
      %p63 = scmp.eq.s32.totalorder %s62, 0
      %s65 = sadd.s32 %s64, 1
      %s66 = scalar_select %p63, %s64, %s65
      %p69 = pneg %p63
      %p70 = scmp.eq.s32.totalorder %s28, 1
      %p71 = por %p69, %p70
      %p72 = scmp.ne.s32.totalorder %s64, %s67
      %p73 = scmp.eq.s32.totalorder %s28, 0
      %p74 = por %p72, %p73
      %p75 = scmp.ne.s32.totalorder %s64, %s67
      %p76 = scmp.eq.s32.totalorder %s33, 1
      %p77 = por %p75, %p76
      %p78 = scmp.ne.s32.totalorder %s67, %s68
      %p79 = scmp.eq.s32.totalorder %s33, 0
      %p80 = por %p78, %p79
      %p81 = scmp.ne.s32.totalorder %s67, %s68
      %p82 = scmp.eq.s32.totalorder %s34, 1
      %p83 = por %p81, %p82
      %p85 = scmp.ne.s32.totalorder %s68, %s84
      %p86 = scmp.eq.s32.totalorder %s34, 0
      %p87 = por %p85, %p86
      %s89 = sadd.s32 %s88, 1
      %p92 = scmp.eq.s32.totalorder %s28, 1
      %p93 = scmp.ne.s32.totalorder %s88, %s90
      %p94 = scmp.eq.s32.totalorder %s28, 0
      %p95 = por %p93, %p94
      %p96 = scmp.ne.s32.totalorder %s88, %s90
      %p97 = scmp.eq.s32.totalorder %s33, 1
      %p98 = por %p96, %p97
      %p99 = scmp.ne.s32.totalorder %s90, %s91
      %p100 = scmp.eq.s32.totalorder %s33, 0
      %p101 = por %p99, %p100
      %p102 = scmp.ne.s32.totalorder %s90, %s91
      %p103 = scmp.eq.s32.totalorder %s34, 1
      %p104 = por %p102, %p103
      %p106 = scmp.ne.s32.totalorder %s91, %s105
      %p107 = scmp.eq.s32.totalorder %s34, 0
      %p108 = por %p106, %p107
      %s110 = sadd.s32 %s109, 1
      %p113 = scmp.eq.s32.totalorder %s28, 1
      %p114 = scmp.ne.s32.totalorder %s109, %s111
      %p115 = scmp.eq.s32.totalorder %s28, 0
      %p116 = por %p114, %p115
      %p117 = scmp.ne.s32.totalorder %s109, %s111
      %p118 = scmp.eq.s32.totalorder %s33, 1
      %p119 = por %p117, %p118
      %p120 = scmp.ne.s32.totalorder %s111, %s112
      %p121 = scmp.eq.s32.totalorder %s33, 0
      %p122 = por %p120, %p121
      %p123 = scmp.ne.s32.totalorder %s111, %s112
      %p124 = scmp.eq.s32.totalorder %s34, 1
      %p125 = por %p123, %p124
      %p127 = scmp.ne.s32.totalorder %s112, %s126
      %p128 = scmp.eq.s32.totalorder %s34, 0
      %p129 = por %p127, %p128
      %s131 = sadd.s32 %s130, 1
      %p134 = scmp.eq.s32.totalorder %s28, 1
      %p135 = scmp.ne.s32.totalorder %s130, %s132
      %p136 = scmp.eq.s32.totalorder %s28, 0
      %p137 = por %p135, %p136
      %p138 = scmp.ne.s32.totalorder %s130, %s132
      %p139 = scmp.eq.s32.totalorder %s33, 1
      %p140 = por %p138, %p139
      %p141 = scmp.ne.s32.totalorder %s132, %s133
      %p142 = scmp.eq.s32.totalorder %s33, 0
      %p143 = por %p141, %p142
      %p144 = scmp.ne.s32.totalorder %s132, %s133
      %p145 = scmp.eq.s32.totalorder %s34, 1
      %p146 = por %p144, %p145
      %p148 = scmp.ne.s32.totalorder %s133, %s147
      %p149 = scmp.eq.s32.totalorder %s34, 0
      %p150 = por %p148, %p149
      %s152 = sadd.s32 %s151, 1
      %p155 = scmp.eq.s32.totalorder %s28, 1
      %p156 = scmp.ne.s32.totalorder %s151, %s153
      %p157 = scmp.eq.s32.totalorder %s28, 0
      %p158 = por %p156, %p157
      %p159 = scmp.ne.s32.totalorder %s151, %s153
      %p160 = scmp.eq.s32.totalorder %s33, 1
      %p161 = por %p159, %p160
      %p162 = scmp.ne.s32.totalorder %s153, %s154
      %p163 = scmp.eq.s32.totalorder %s33, 0
      %p164 = por %p162, %p163
      %p165 = scmp.ne.s32.totalorder %s153, %s154
      %p166 = scmp.eq.s32.totalorder %s34, 1
      %p167 = por %p165, %p166
      %p169 = scmp.ne.s32.totalorder %s154, %s168
      %p170 = scmp.eq.s32.totalorder %s34, 0
      %p171 = por %p169, %p170
      %s173 = sadd.s32 %s172, 1
      %p176 = scmp.eq.s32.totalorder %s28, 1
      %p177 = scmp.ne.s32.totalorder %s172, %s174
      %p178 = scmp.eq.s32.totalorder %s28, 0
      %p179 = por %p177, %p178
      %p180 = scmp.ne.s32.totalorder %s172, %s174
      %p181 = scmp.eq.s32.totalorder %s33, 1
      %p182 = por %p180, %p181
      %p183 = scmp.ne.s32.totalorder %s174, %s175
      %p184 = scmp.eq.s32.totalorder %s33, 0
      %p185 = por %p183, %p184
      %p186 = scmp.ne.s32.totalorder %s174, %s175
      %p187 = scmp.eq.s32.totalorder %s34, 1
      %p188 = por %p186, %p187
      %p190 = scmp.ne.s32.totalorder %s175, %s189
      %p191 = scmp.eq.s32.totalorder %s34, 0
      %p192 = por %p190, %p191
      %s194 = sadd.s32 %s193, 1
      %p197 = scmp.eq.s32.totalorder %s28, 1
      %p198 = scmp.ne.s32.totalorder %s193, %s195
      %p199 = scmp.eq.s32.totalorder %s28, 0
      %p200 = por %p198, %p199
      %p201 = scmp.ne.s32.totalorder %s193, %s195
      %p202 = scmp.eq.s32.totalorder %s33, 1
      %p203 = por %p201, %p202
      %p204 = scmp.ne.s32.totalorder %s195, %s196
      %p205 = scmp.eq.s32.totalorder %s33, 0
      %p206 = por %p204, %p205
      %p207 = scmp.ne.s32.totalorder %s195, %s196
      %p208 = scmp.eq.s32.totalorder %s34, 1
      %p209 = por %p207, %p208
      %p211 = scmp.ne.s32.totalorder %s196, %s210
      %p212 = scmp.eq.s32.totalorder %s34, 0
      %p213 = por %p211, %p212
      %s215 = sadd.s32 %s214, 1
      %p218 = scmp.eq.s32.totalorder %s28, 1
      %p219 = scmp.ne.s32.totalorder %s214, %s216
      %p220 = scmp.eq.s32.totalorder %s28, 0
      %p221 = por %p219, %p220
      %p222 = scmp.ne.s32.totalorder %s214, %s216
      %p223 = scmp.eq.s32.totalorder %s33, 1
      %p224 = por %p222, %p223
      %p225 = scmp.ne.s32.totalorder %s216, %s217
      %p226 = scmp.eq.s32.totalorder %s33, 0
      %p227 = por %p225, %p226
      %p228 = scmp.ne.s32.totalorder %s216, %s217
      %p229 = scmp.eq.s32.totalorder %s34, 1
      %p230 = por %p228, %p229
      %p232 = scmp.ne.s32.totalorder %s217, %s231
      %p233 = scmp.eq.s32.totalorder %s34, 0
      %p234 = por %p232, %p233
      %s236 = sadd.s32 %s235, 1
      %p239 = scmp.eq.s32.totalorder %s28, 1
      %p240 = scmp.ne.s32.totalorder %s235, %s237
      %p241 = scmp.eq.s32.totalorder %s28, 0
      %p242 = por %p240, %p241
      %p243 = scmp.ne.s32.totalorder %s235, %s237
      %p244 = scmp.eq.s32.totalorder %s33, 1
      %p245 = por %p243, %p244
      %p246 = scmp.ne.s32.totalorder %s237, %s238
      %p247 = scmp.eq.s32.totalorder %s33, 0
      %p248 = por %p246, %p247
      %p249 = scmp.ne.s32.totalorder %s237, %s238
      %p250 = scmp.eq.s32.totalorder %s34, 1
      %p251 = por %p249, %p250
      %p253 = scmp.ne.s32.totalorder %s238, %s252
      %p254 = scmp.eq.s32.totalorder %s34, 0
      %p255 = por %p253, %p254
      %s257 = sadd.s32 %s256, 1
      %p260 = scmp.eq.s32.totalorder %s28, 1
      %p261 = scmp.ne.s32.totalorder %s256, %s258
      %p262 = scmp.eq.s32.totalorder %s28, 0
      %p263 = por %p261, %p262
      %p264 = scmp.ne.s32.totalorder %s256, %s258
      %p265 = scmp.eq.s32.totalorder %s33, 1
      %p266 = por %p264, %p265
      %p267 = scmp.ne.s32.totalorder %s258, %s259
      %p268 = scmp.eq.s32.totalorder %s33, 0
      %p269 = por %p267, %p268
      %p270 = scmp.ne.s32.totalorder %s258, %s259
      %p271 = scmp.eq.s32.totalorder %s34, 1
      %p272 = por %p270, %p271
      %p274 = scmp.ne.s32.totalorder %s259, %s273
      %p275 = scmp.eq.s32.totalorder %s34, 0
      %p276 = por %p274, %p275
      %s277 = ssub.s32 %s28, %s35
      %p278 = scmp.eq.s32.totalorder %s277, 0
      %s280 = sadd.s32 %s279, 1
      %s281 = scalar_select %p278, %s279, %s280
      %p284 = pneg %p278
      %p285 = scmp.eq.s32.totalorder %s28, 1
      %p286 = por %p284, %p285
      %p287 = scmp.ne.s32.totalorder %s279, %s282
      %p288 = scmp.eq.s32.totalorder %s28, 0
      %p289 = por %p287, %p288
      %p290 = scmp.ne.s32.totalorder %s279, %s282
      %p291 = scmp.eq.s32.totalorder %s33, 1
      %p292 = por %p290, %p291
      %p293 = scmp.ne.s32.totalorder %s282, %s283
      %p294 = scmp.eq.s32.totalorder %s33, 0
      %p295 = por %p293, %p294
      %p296 = scmp.ne.s32.totalorder %s282, %s283
      %p297 = scmp.eq.s32.totalorder %s34, 1
      %p298 = por %p296, %p297
      %p300 = scmp.ne.s32.totalorder %s283, %s299
      %p301 = scmp.eq.s32.totalorder %s34, 0
      %p302 = por %p300, %p301
      %s303 = ssub.s32 %s28, %s35
      %p304 = scmp.eq.s32.totalorder %s303, 0
      %s306 = sadd.s32 %s305, 1
      %s307 = scalar_select %p304, %s305, %s306
      %p310 = pneg %p304
      %p311 = scmp.eq.s32.totalorder %s28, 1
      %p312 = por %p310, %p311
      %p313 = scmp.ne.s32.totalorder %s305, %s308
      %p314 = scmp.eq.s32.totalorder %s28, 0
      %p315 = por %p313, %p314
      %p316 = scmp.ne.s32.totalorder %s305, %s308
      %p317 = scmp.eq.s32.totalorder %s33, 1
      %p318 = por %p316, %p317
      %p319 = scmp.ne.s32.totalorder %s308, %s309
      %p320 = scmp.eq.s32.totalorder %s33, 0
      %p321 = por %p319, %p320
      %p322 = scmp.ne.s32.totalorder %s308, %s309
      %p323 = scmp.eq.s32.totalorder %s34, 1
      %p324 = por %p322, %p323
      %p326 = scmp.ne.s32.totalorder %s309, %s325
      %p327 = scmp.eq.s32.totalorder %s34, 0
      %p328 = por %p326, %p327
      %s329 = ssub.s32 %s28, %s35
      %p330 = scmp.eq.s32.totalorder %s329, 0
      %s332 = sadd.s32 %s331, 1
      %s333 = scalar_select %p330, %s331, %s332
      %p336 = pneg %p330
      %p337 = scmp.eq.s32.totalorder %s28, 1
      %p338 = por %p336, %p337
      %p339 = scmp.ne.s32.totalorder %s331, %s334
      %p340 = scmp.eq.s32.totalorder %s28, 0
      %p341 = por %p339, %p340
      %p342 = scmp.ne.s32.totalorder %s331, %s334
      %p343 = scmp.eq.s32.totalorder %s33, 1
      %p344 = por %p342, %p343
      %p345 = scmp.ne.s32.totalorder %s334, %s335
      %p346 = scmp.eq.s32.totalorder %s33, 0
      %p347 = por %p345, %p346
      %p348 = scmp.ne.s32.totalorder %s334, %s335
      %p349 = scmp.eq.s32.totalorder %s34, 1
      %p350 = por %p348, %p349
      %p352 = scmp.ne.s32.totalorder %s335, %s351
      %p353 = scmp.eq.s32.totalorder %s34, 0
      %p354 = por %p352, %p353
      %p355 = scmp.le.s32.totalorder 1, %s28
      %p356 = scmp.lt.s32.totalorder %s28, 3
      %p357 = pnand %p355, %p356
      %p358 = pneg %p357
      // Predicated region
      $region9: #{fn.1} parent=5 // pred_check
        _
      $region10: #{fn.1} parent=5 // pred_check_branch
        %360 = sbr.rel (%p357) target = $region12
      $region11: #{fn.1} parent=5 // pred_region
        %s361 = ssub.s32 %s28, 1
        // Predicated region
        $region13: #{fn.1} parent=11 // pred_check
          %p362 = pneg %p101
        $region14: #{fn.1} parent=11 // pred_check_branch
          %364 = sbr.rel (%p362) target = $region16
        $region15: #{fn.1} parent=11 // pred_region
          _
        $region16: #{fn.1} parent=11 // pred_fallthru
          _
        // Predicated region
        $region17: #{fn.1} parent=11 // pred_check
          %p365 = pneg %p122
        $region18: #{fn.1} parent=11 // pred_check_branch
          %367 = sbr.rel (%p365) target = $region20
        $region19: #{fn.1} parent=11 // pred_region
          %369 = vsyncadd [#allocation5], 0
          %s370 = sshll.u32 %s3, 4
          %s371 = int_to_ptr.hbm [resolvable:$true] %s370
          %s372 = sshll.u32 [#allocation6], 4
          %s373 = int_to_ptr.vmem [resolvable:$true] %s372
          %378 = dma.hbm_to_vmem [thread:$0]  %s371, 256, %s373, [#allocation5], 128, 128, 8
        $region20: #{fn.1} parent=11 // pred_fallthru
          _
        // Predicated region
        $region21: #{fn.1} parent=11 // pred_check
          %p379 = pneg %p143
        $region22: #{fn.1} parent=11 // pred_check_branch
          %381 = sbr.rel (%p379) target = $region24
        $region23: #{fn.1} parent=11 // pred_region
          %383 = vsyncadd [#allocation8], 0
          %s384 = sshll.u32 %s4, 4
          %s385 = int_to_ptr.hbm [resolvable:$true] %s384
          %s386 = sshll.u32 [#allocation7], 4
          %s387 = int_to_ptr.vmem [resolvable:$true] %s386
          %392 = dma.hbm_to_vmem [thread:$0]  %s385, 512, %s387, [#allocation8], 128, 128, 8
        $region24: #{fn.1} parent=11 // pred_fallthru
          _
        // Predicated region
        $region25: #{fn.1} parent=11 // pred_check
          %p393 = pneg %p164
        $region26: #{fn.1} parent=11 // pred_check_branch
          %395 = sbr.rel (%p393) target = $region28
        $region27: #{fn.1} parent=11 // pred_region
          %397 = vsyncadd [#allocation8], 0
          %s398 = sshll.u32 %s5, 4
          %s399 = int_to_ptr.hbm [resolvable:$true] %s398
          %s400 = sshll.u32 [#allocation9], 4
          %s401 = int_to_ptr.vmem [resolvable:$true] %s400
          %406 = dma.hbm_to_vmem [thread:$0]  %s399, 2304, %s401, [#allocation8], 384, 384, 24
        $region28: #{fn.1} parent=11 // pred_fallthru
          _
        // Predicated region
        $region29: #{fn.1} parent=11 // pred_check
          %p407 = pneg %p185
        $region30: #{fn.1} parent=11 // pred_check_branch
          %409 = sbr.rel (%p407) target = $region32
        $region31: #{fn.1} parent=11 // pred_region
          _
        $region32: #{fn.1} parent=11 // pred_fallthru
          _
        // Predicated region
        $region33: #{fn.1} parent=11 // pred_check
          %p410 = pneg %p206
        $region34: #{fn.1} parent=11 // pred_check_branch
          %412 = sbr.rel (%p410) target = $region36
        $region35: #{fn.1} parent=11 // pred_region
          %414 = vsyncadd [#allocation11], 0
          %s415 = sshll.u32 %s7, 4
          %s416 = int_to_ptr.hbm [resolvable:$true] %s415
          %s417 = sshll.u32 [#allocation10], 4
          %s418 = int_to_ptr.vmem [resolvable:$true] %s417
          %423 = dma.hbm_to_vmem [thread:$0]  %s416, 12288, %s418, [#allocation11], 768, 768, 48
        $region36: #{fn.1} parent=11 // pred_fallthru
          _
        // Predicated region
        $region37: #{fn.1} parent=11 // pred_check
          %p424 = pneg %p227
        $region38: #{fn.1} parent=11 // pred_check_branch
          %426 = sbr.rel (%p424) target = $region40
        $region39: #{fn.1} parent=11 // pred_region
          _
        $region40: #{fn.1} parent=11 // pred_fallthru
          _
        // Predicated region
        $region41: #{fn.1} parent=11 // pred_check
          %p427 = pneg %p248
        $region42: #{fn.1} parent=11 // pred_check_branch
          %429 = sbr.rel (%p427) target = $region44
        $region43: #{fn.1} parent=11 // pred_region
          _
        $region44: #{fn.1} parent=11 // pred_fallthru
          _
        // Predicated region
        $region45: #{fn.1} parent=11 // pred_check
          %p430 = pneg %p269
        $region46: #{fn.1} parent=11 // pred_check_branch
          %432 = sbr.rel (%p430) target = $region48
        $region47: #{fn.1} parent=11 // pred_region
          _
        $region48: #{fn.1} parent=11 // pred_fallthru
          _
      $region12: #{fn.1} parent=5 // pred_fallthru
        _
      %p433 = scmp.lt.s32.totalorder %s28, 2
      // Predicated region
      $region49: #{fn.1} parent=5 // pred_check
        %p434 = pneg %p433
      $region50: #{fn.1} parent=5 // pred_check_branch
        %436 = sbr.rel (%p434) target = $region52
      $region51: #{fn.1} parent=5 // pred_region
        // Predicated region
        $region53: #{fn.1} parent=51 // pred_check
          %p437 = pneg %p48
        $region54: #{fn.1} parent=51 // pred_check_branch
          %439 = sbr.rel (%p437) target = $region56
        $region55: #{fn.1} parent=51 // pred_region
          %s440 = sand.u32 %s38, 1
          %s441 = scalar_lea.sflag [#allocation3], %s440
          %s442 = sand.u32 %s38, 1
          %s443 = smul.addr %s442, 48
          %s444 = scalar_lea.vmem [#allocation2], %s443
          %446 = vsyncadd %s441, 0
          %s447 = smul.addr %s28, 6
          %s448 = smul.addr %s447, 8
          %s449 = scalar_lea.hbm %s0, %s448
          %s450 = sshll.u32 %s449, 4
          %s451 = int_to_ptr.hbm [resolvable:$true] %s450
          %s452 = sshll.u32 %s444, 4
          %s453 = int_to_ptr.vmem [resolvable:$true] %s452
          %458 = dma.hbm_to_vmem [thread:$0]  %s451, 768, %s453, %s441, 128, 128, 8
        $region56: #{fn.1} parent=51 // pred_fallthru
          _
        // Predicated region
        $region57: #{fn.1} parent=51 // pred_check
          %p459 = pneg %p74
        $region58: #{fn.1} parent=51 // pred_check_branch
          %461 = sbr.rel (%p459) target = $region60
        $region59: #{fn.1} parent=51 // pred_region
          %s462 = sand.u32 %s28, 1
          %s463 = scalar_lea.sflag [#allocation5], %s462
          %s464 = sand.u32 %s64, 1
          %s465 = smul.addr %s464, 48
          %s466 = scalar_lea.vmem [#allocation4], %s465
          %468 = vsyncadd %s463, 0
          %s469 = smul.addr %s28, 6
          %s470 = smul.addr %s469, 8
          %s471 = scalar_lea.hbm %s1, %s470
          %s472 = sshll.u32 %s471, 4
          %s473 = int_to_ptr.hbm [resolvable:$true] %s472
          %s474 = sshll.u32 %s466, 4
          %s475 = int_to_ptr.vmem [resolvable:$true] %s474
          %480 = dma.hbm_to_vmem [thread:$0]  %s473, 768, %s475, %s463, 128, 128, 8
        $region60: #{fn.1} parent=51 // pred_fallthru
          _
      $region52: #{fn.1} parent=5 // pred_fallthru
        _
      %p481 = scmp.le.s32.totalorder 1, %s28
      %p482 = scmp.lt.s32.totalorder %s28, 3
      %p483 = pnand %p481, %p482
      %p484 = pneg %p483
      // Predicated region
      $region61: #{fn.1} parent=5 // pred_check
        _
      $region62: #{fn.1} parent=5 // pred_check_branch
        %486 = sbr.rel (%p483) target = $region64
      $region63: #{fn.1} parent=5 // pred_region
        %s487 = ssub.s32 %s28, 1
        %s488 = sand.u32 %s41, 1
        %s489 = scalar_lea.sflag [#allocation3], %s488
        %s490 = sand.u32 %s41, 1
        %s491 = smul.addr %s490, 48
        %s492 = scalar_lea.vmem [#allocation2], %s491
        // Predicated region
        $region65: #{fn.1} parent=63 // pred_check
          %p493 = pneg %p54
        $region66: #{fn.1} parent=63 // pred_check_branch
          %495 = sbr.rel (%p493) target = $region68
        $region67: #{fn.1} parent=63 // pred_region
          %497 = dma.done %s489, 768
        $region68: #{fn.1} parent=63 // pred_fallthru
          _
        %s498 = sand.u32 %s33, 1
        %s499 = scalar_lea.sflag [#allocation5], %s498
        %s500 = sand.u32 %s67, 1
        %s501 = smul.addr %s500, 48
        %s502 = scalar_lea.vmem [#allocation4], %s501
        // Predicated region
        $region69: #{fn.1} parent=63 // pred_check
          %p503 = pneg %p80
        $region70: #{fn.1} parent=63 // pred_check_branch
          %505 = sbr.rel (%p503) target = $region72
        $region71: #{fn.1} parent=63 // pred_region
          %507 = dma.done %s499, 768
        $region72: #{fn.1} parent=63 // pred_fallthru
          _
        // Predicated region
        $region73: #{fn.1} parent=63 // pred_check
          %p508 = pneg %p122
        $region74: #{fn.1} parent=63 // pred_check_branch
          %510 = sbr.rel (%p508) target = $region76
        $region75: #{fn.1} parent=63 // pred_region
          %512 = dma.done [#allocation5], 256
        $region76: #{fn.1} parent=63 // pred_fallthru
          _
        // Predicated region
        $region77: #{fn.1} parent=63 // pred_check
          %p513 = pneg %p143
        $region78: #{fn.1} parent=63 // pred_check_branch
          %515 = sbr.rel (%p513) target = $region80
        $region79: #{fn.1} parent=63 // pred_region
          %517 = dma.done [#allocation8], 512
        $region80: #{fn.1} parent=63 // pred_fallthru
          _
        // Predicated region
        $region81: #{fn.1} parent=63 // pred_check
          %p518 = pneg %p164
        $region82: #{fn.1} parent=63 // pred_check_branch
          %520 = sbr.rel (%p518) target = $region84
        $region83: #{fn.1} parent=63 // pred_region
          %522 = dma.done [#allocation8], 2304
        $region84: #{fn.1} parent=63 // pred_fallthru
          _
        // Predicated region
        $region85: #{fn.1} parent=63 // pred_check
          %p523 = pneg %p206
        $region86: #{fn.1} parent=63 // pred_check_branch
          %525 = sbr.rel (%p523) target = $region88
        $region87: #{fn.1} parent=63 // pred_region
          %527 = dma.done [#allocation11], 12288
        $region88: #{fn.1} parent=63 // pred_fallthru
          _
        %s528 = sand.u32 %s41, 1
        %s529 = scalar_lea.sflag [#allocation3], %s528
        %s530 = sand.u32 %s41, 1
        %s531 = smul.addr %s530, 48
        %s532 = scalar_lea.vmem [#allocation2], %s531
        %p533 = pneg %p54
        %p534 = pneg %p51
        %s535 = sand.u32 %s33, 1
        %s536 = scalar_lea.sflag [#allocation5], %s535
        %s537 = sand.u32 %s67, 1
        %s538 = smul.addr %s537, 48
        %s539 = scalar_lea.vmem [#allocation4], %s538
        %p540 = pneg %p80
        %p541 = pneg %p77
        %p542 = pneg %p101
        %p543 = pneg %p98
        %p544 = pneg %p122
        %p545 = pneg %p119
        %p546 = pneg %p143
        %p547 = pneg %p140
        %p548 = pneg %p164
        %p549 = pneg %p161
        %p550 = pneg %p185
        %p551 = pneg %p182
        %p552 = pneg %p206
        %p553 = pneg %p203
        %p554 = pneg %p227
        %p555 = pneg %p224
        %p556 = pneg %p248
        %p557 = pneg %p245
        %p558 = pneg %p269
        %p559 = pneg %p266
        %p560 = pneg %p295
        %p561 = pneg %p292
        %p562 = scmp.lt.s32.totalorder %s33, 1
        %s563 = scalar_select %p562, %s33, 1
        %s564 = scalar_lea.vmem %s11, %s563
        %p565 = pneg %p321
        %p566 = pneg %p318
        %p567 = scmp.lt.s32.totalorder %s33, 1
        %s568 = scalar_select %p567, %s33, 1
        %s569 = scalar_lea.vmem %s12, %s568
        %p570 = pneg %p347
        %p571 = pneg %p344
        %p572 = scmp.lt.s32.totalorder %s33, 1
        %s573 = scalar_select %p572, %s33, 1
        %s574 = scalar_lea.vmem %s13, %s573
        %p575 = scmp.lt.s32.totalorder %s33, 1
        %s576 = scalar_select %p575, %s33, 1
        %s577 = scalar_lea.vmem %s11, %s576
        %p578 = scmp.lt.s32.totalorder %s33, 1
        %s579 = scalar_select %p578, %s33, 1
        %s580 = scalar_lea.vmem %s12, %s579
        %p581 = scmp.lt.s32.totalorder %s33, 1
        %s582 = scalar_select %p581, %s33, 1
        %s583 = scalar_lea.vmem %s13, %s582
        %v584 = vld [vmem:[%s492] sm:$0xff]
        %v585 = vld [vmem:[%s492 + $0x8] sm:$0xff]
        %s586 = scalar_lea.vmem %s492, 16 [#allocation2]
        %v587 = vld [vmem:[%s586] sm:$0xff]
        %v588 = vld [vmem:[%s586 + $0x8] sm:$0xff]
        %s589 = scalar_lea.vmem %s492, 32 [#allocation2]
        %v590 = vld [vmem:[%s589] sm:$0xff]
        %v591 = vld [vmem:[%s589 + $0x8] sm:$0xff]
        %v592 = vld [vmem:[%s502] sm:$0xff]
        %v593 = vld [vmem:[%s502 + $0x8] sm:$0xff]
        %s594 = scalar_lea.vmem %s502, 16 [#allocation4]
        %v595 = vld [vmem:[%s594] sm:$0xff]
        %v596 = vld [vmem:[%s594 + $0x8] sm:$0xff]
        %s597 = scalar_lea.vmem %s502, 32 [#allocation4]
        %v598 = vld [vmem:[%s597] sm:$0xff]
        %v599 = vld [vmem:[%s597 + $0x8] sm:$0xff]
        %v600 = vsub.f32 %v584, %v592
        %v601 = vsub.f32 %v585, %v593
        %v602 = vmul.f32 %v600, %v600
        %v603 = vmul.f32 %v601, %v601
        %vm604 = vcmask 130048
        %v605 = vsel %vm604, %v602, 0.0
        %v606 = vsel %vm604, %v603, 0.0
        %v607 = vadd.f32 %v605, %v606
        %608 = vadd.xlane.f32.xlu0 %v607
        %v609 = vpop.xlane.xlu0 %608
        %v610 = vrot.slane %v609, 4
        %v611 = vadd.f32 %v609, %v610
        %v612 = vrot.slane %v611, 2
        %v613 = vadd.f32 %v611, %v612
        %v614 = vrot.slane %v613, 1
        %v615 = vadd.f32 %v613, %v614
        %s616 = vtos %v615
        %v617 = vstv %s616
        %v618 = vsub.f32 %v587, %v595
        %v619 = vsub.f32 %v588, %v596
        %v620 = vmul.f32 %v618, %v618
        %v621 = vmul.f32 %v619, %v619
        %v622 = vsel %vm604, %v620, 0.0
        %v623 = vsel %vm604, %v621, 0.0
        %v624 = vadd.f32 %v622, %v623
        %625 = vadd.xlane.f32.xlu0 %v624
        %v626 = vpop.xlane.xlu0 %625
        %v627 = vrot.slane %v626, 4
        %v628 = vadd.f32 %v626, %v627
        %v629 = vrot.slane %v628, 2
        %v630 = vadd.f32 %v628, %v629
        %v631 = vrot.slane %v630, 1
        %v632 = vadd.f32 %v630, %v631
        %s633 = vtos %v632
        %v634 = vstv %s633
        %v635 = vadd.f32 %v617, %v634
        %v636 = vsub.f32 %v590, %v598
        %v637 = vsub.f32 %v591, %v599
        %v638 = vmul.f32 %v636, %v636
        %v639 = vmul.f32 %v637, %v637
        %v640 = vsel %vm604, %v638, 0.0
        %v641 = vsel %vm604, %v639, 0.0
        %v642 = vadd.f32 %v640, %v641
        %643 = vadd.xlane.f32.xlu0 %v642
        %v644 = vpop.xlane.xlu0 %643
        %v645 = vrot.slane %v644, 4
        %v646 = vadd.f32 %v644, %v645
        %v647 = vrot.slane %v646, 2
        %v648 = vadd.f32 %v646, %v647
        %v649 = vrot.slane %v648, 1
        %v650 = vadd.f32 %v648, %v649
        %s651 = vtos %v650
        %v652 = vstv %s651
        %v653 = vadd.f32 %v635, %v652
        %v654 = vmul.f32 %v653, 0.0013020834
        %v655 = vadd.f32 %v654, 1e-08
        %v656 = vlog2.pop %v655
        %v657 = vmul.f32 %v656, 0.6931472
        %v658 = vmul.f32 %v657, -4.3429446
        %659 = vst [vmem:[%s577] sm:$0x1] %v658
        %v660 = vmul.f32 %v584, 65.481
        %v661 = vmul.f32 %v585, 65.481
        %v662 = vmul.f32 %v587, 128.553
        %v663 = vmul.f32 %v588, 128.553
        %v664 = vadd.f32 %v660, %v662
        %v665 = vadd.f32 %v661, %v663
        %v666 = vmul.f32 %v590, 24.966
        %v667 = vmul.f32 %v591, 24.966
        %v668 = vadd.f32 %v664, %v666
        %v669 = vadd.f32 %v665, %v667
        %v670 = vadd.f32 %v668, 16.0
        %v671 = vadd.f32 %v669, 16.0
        %v672 = vmul.f32 %v592, 65.481
        %v673 = vmul.f32 %v593, 65.481
        %v674 = vmul.f32 %v595, 128.553
        %v675 = vmul.f32 %v596, 128.553
        %v676 = vadd.f32 %v672, %v674
        %v677 = vadd.f32 %v673, %v675
        %v678 = vmul.f32 %v598, 24.966
        %v679 = vmul.f32 %v599, 24.966
        %v680 = vadd.f32 %v676, %v678
        %v681 = vadd.f32 %v677, %v679
        %v682 = vadd.f32 %v680, 16.0
        %v683 = vadd.f32 %v681, 16.0
        %v684 = vmul.f32 %v670, %v670
        %v685 = vmul.f32 %v671, %v671
        %v686 = vmul.f32 %v682, %v682
        %v687 = vmul.f32 %v683, %v683
        %v688 = vmul.f32 %v670, %v682
        %v689 = vmul.f32 %v671, %v683
        %692 = vrot.lane.b32.xlu0 %v682, 16
        %v693 = vpop.permute.xlu0 %692
        %694 = vrot.lane.b32.xlu0 %v683, 16
        %v695 = vpop.permute.xlu0 %694
        %700 = vrot.lane.b32.xlu0 %v684, 32
        %v701 = vpop.permute.xlu0 %700
        %702 = vrot.lane.b32.xlu0 %v685, 32
        %v703 = vpop.permute.xlu0 %702
        %708 = vrot.lane.b32.xlu0 %v686, 48
        %v709 = vpop.permute.xlu0 %708
        %710 = vrot.lane.b32.xlu0 %v687, 48
        %v711 = vpop.permute.xlu0 %710
        %716 = vrot.lane.b32.xlu0 %v688, 64
        %v717 = vpop.permute.xlu0 %716
        %718 = vrot.lane.b32.xlu0 %v689, 64
        %v719 = vpop.permute.xlu0 %718
        %v722 = vsel %vm604, %v670, %v693
        %v723 = vsel %vm604, %v671, %v695
        %vm724 = vcmask 261120
        %v725 = vsel %vm724, %v722, %v701
        %v726 = vsel %vm724, %v723, %v703
        %vm727 = vcmask 392192
        %v728 = vsel %vm727, %v725, %v709
        %v729 = vsel %vm727, %v726, %v711
        %vm730 = vcmask 523264
        %v731 = vsel %vm730, %v728, %v717
        %v732 = vsel %vm730, %v729, %v719
        %v733 = vld [vmem:[%s2] sm:$0x3f]
        %v735 = vsel %vm604, %v733, 0
        %737 = vmatpush.msra.mxu0 0.0
        %738 = vmatpush.msra.mxu0 0.0
        %739 = vmatpush.msra.mxu0 0.0
        %740 = vmatpush.msra.mxu0 0.0
        %741 = vmatpush.msra.mxu0 0.0
        %742 = vmatpush.msra.mxu0 0.0
        %743 = vmatpush.msra.mxu0 0.0
        %744 = vmatpush.msra.mxu0 0.0
        %745 = vmatpush.msra.mxu0 0.0
        %746 = vmatpush.msra.mxu0 0.0
        %747 = vmatpush.msra.mxu0 0.0
        %748 = vmatpush.msra.mxu0 0.0
        %749 = vmatpush.msra.mxu0 0.0
        %750 = vmatpush.msra.mxu0 0.0
        %751 = vmatpush.msra.mxu0 %v732
        %752 = vmatpush.msra.mxu0 %v731
        %753 = vmatmul.f32.gmra.mxu0 %v735
        %v754 = vpop.f32.mrf.mxu0
        %v755 = vadd.f32 0.0, %v754
        %756 = vdwg.mxu0
        %v758 = vrot.slane %v755, 2
        %759 = vrot.lane.b32.xlu0 %v758, 112
        %v760 = vpop.permute.xlu0 %759
        %v762 = vrot.slane %v755, 4
        %763 = vrot.lane.b32.xlu0 %v762, 96
        %v764 = vpop.permute.xlu0 %763
        %v766 = vrot.slane %v755, 6
        %767 = vrot.lane.b32.xlu0 %v766, 80
        %v768 = vpop.permute.xlu0 %767
        %770 = vrot.lane.b32.xlu0 %v755, 64
        %v771 = vpop.permute.xlu0 %770
        %vm772 = vcmask 1045504
        %v773 = vsel %vm772, %v755, %v760
        %vm774 = vcmask 1043456
        %v775 = vsel %vm774, %v760, %v764
        %vm776 = vcmask 1041408
        %v777 = vsel %vm776, %v764, %v768
        %v778 = vld [vmem:[#allocation6] sm:$0xff]
        %v779 = vld [vmem:[#allocation6 + $0x8] sm:$0xff]
        %v781 = vsel %vm604, %v773, 0
        %v784 = vsel %vm604, %v775, 0
        %v787 = vsel %vm604, %v777, 0
        %v789 = vsel %vm604, %v771, 0
        %791 = vmatpush.msra.mxu0 0.0
        %792 = vmatpush.msra.mxu0 0.0
        %793 = vmatpush.msra.mxu0 0.0
        %794 = vmatpush.msra.mxu0 0.0
        %795 = vmatpush.msra.mxu0 0.0
        %796 = vmatpush.msra.mxu0 0.0
        %797 = vmatpush.msra.mxu0 0.0
        %798 = vmatpush.msra.mxu0 0.0
        %799 = vmatpush.msra.mxu0 0.0
        %800 = vmatpush.msra.mxu0 0.0
        %801 = vmatpush.msra.mxu0 0.0
        %802 = vmatpush.msra.mxu0 0.0
        %803 = vmatpush.msra.mxu0 0.0
        %804 = vmatpush.msra.mxu0 0.0
        %805 = vmatpush.msra.mxu0 %v779
        %806 = vmatpush.msra.mxu0 %v778
        %807 = vmatmul.f32.gmra.mxu0 %v781
        %v808 = vpop.f32.mrf.mxu0
        %v809 = vadd.f32 0.0, %v808
        %810 = vmatmul.f32.gmra.mxu0 %v784
        %v811 = vpop.f32.mrf.mxu0
        %v812 = vadd.f32 0.0, %v811
        %813 = vmatmul.f32.gmra.mxu0 %v787
        %v814 = vpop.f32.mrf.mxu0
        %v815 = vadd.f32 0.0, %v814
        %816 = vmatmul.f32.gmra.mxu0 %v789
        %v817 = vpop.f32.mrf.mxu0
        %v818 = vadd.f32 0.0, %v817
        %819 = vdwg.mxu0
        %v820 = vmul.f32 %v809, %v809
        %v822 = vrot.slane %v820, 4
        %v824 = vsub.f32 %v812, %v822
        %v825 = vsub.f32 %v815, %v822
        %v826 = vmul.f32 %v812, %v812
        %v828 = vrot.slane %v826, 4
        %v829 = vsel %vm774, %v822, %v828
        %v831 = vsub.f32 %v815, %v829
        %v834 = vrot.slane %v809, 6
        %v835 = vrot.slane %v812, 6
        %v836 = vsel %vm776, %v834, %v835
        %v838 = vmul.f32 %v809, %v836
        %v839 = vsub.f32 %v818, %v838
        %v840 = vmul.f32 %v809, 2.0
        %v841 = vmul.f32 %v840, %v836
        %v842 = vadd.f32 %v841, 6.5025
        %v843 = vmul.f32 %v839, 2.0
        %v844 = vadd.f32 %v843, 58.5225
        %v845 = vmul.f32 %v842, %v844
        %v846 = vrot.slane %v820, 6
        %v847 = vrot.slane %v826, 6
        %v848 = vsel %vm776, %v846, %v847
        %v850 = vadd.f32 %v820, %v848
        %v851 = vadd.f32 %v850, 6.5025
        %v853 = vrot.slane %v831, 6
        %v855 = vadd.f32 %v824, %v853
        %v856 = vadd.f32 %v825, %v853
        %v857 = vadd.f32 %v855, 58.5225
        %v858 = vadd.f32 %v856, 58.5225
        %v861 = vrot.slane %v857, 4
        %v862 = vrot.slane %v858, 4
        %v863 = vsel %vm774, %v861, %v862
        %v865 = vmul.f32 %v851, %v863
        %v866 = vrcp.pop %v865
        %v867 = vmul.f32 %v865, %v866
        %v868 = vsub.f32 1.0, %v867
        %v869 = vmul.f32 %v866, %v868
        %v870 = vadd.f32 %v866, %v869
        %vm871 = vweird.f32 %v865
        %vm872 = vweird.f32 %v866
        %vm873 = vmor %vm871, %vm872
        %v874 = vsel %vm873, %v866, %v870
        %v875 = vand.u32 2147483647, %v865
        %vm876 = vcmp.eq.f32.partialorder %v875, 8.507059e+37
        %v877 = vand.u32 %v865, 2147483648
        %v878 = vor.u32 1.1754944e-38, %v877
        %v879 = vsel %vm876, %v878, %v874
        %v880 = vmul.f32 %v845, %v879
        %vm881 = vcmask 46080
        %v882 = vsel %vm881, %v880, 0.0
        %883 = vadd.xlane.f32.xlu0 %v882
        %v884 = vpop.xlane.xlu0 %883
        %v885 = vrot.slane %v884, 4
        %v886 = vadd.f32 %v884, %v885
        %v887 = vrot.slane %v886, 2
        %v888 = vadd.f32 %v886, %v887
        %v889 = vrot.slane %v888, 1
        %v890 = vadd.f32 %v888, %v889
        %s891 = vtos %v890
        %v892 = vstv %s891
        %v893 = vrcp.pop 36.0
        %v894 = vmul.f32 36.0, %v893
        %v895 = vsub.f32 1.0, %v894
        %v896 = vmul.f32 %v893, %v895
        %v897 = vadd.f32 %v893, %v896
        %vm898 = vweird.f32 %v893
        %v899 = vsel %vm898, %v893, %v897
        %v900 = vmul.f32 %v892, %v899
        %901 = vst [vmem:[%s580] sm:$0x1] %v900
        %904 = vrot.lane.b32.xlu0 %v587, 16
        %v905 = vpop.permute.xlu0 %904
        %906 = vrot.lane.b32.xlu0 %v588, 16
        %v907 = vpop.permute.xlu0 %906
        %912 = vrot.lane.b32.xlu0 %v590, 32
        %v913 = vpop.permute.xlu0 %912
        %914 = vrot.lane.b32.xlu0 %v591, 32
        %v915 = vpop.permute.xlu0 %914
        %v918 = vsel %vm604, %v584, %v905
        %v919 = vsel %vm604, %v585, %v907
        %v920 = vsel %vm724, %v918, %v913
        %v921 = vsel %vm724, %v919, %v915
        %924 = vrot.lane.b32.xlu0 %v595, 16
        %v925 = vpop.permute.xlu0 %924
        %926 = vrot.lane.b32.xlu0 %v596, 16
        %v927 = vpop.permute.xlu0 %926
        %932 = vrot.lane.b32.xlu0 %v598, 32
        %v933 = vpop.permute.xlu0 %932
        %934 = vrot.lane.b32.xlu0 %v599, 32
        %v935 = vpop.permute.xlu0 %934
        %v938 = vsel %vm604, %v592, %v925
        %v939 = vsel %vm604, %v593, %v927
        %v940 = vsel %vm724, %v938, %v933
        %v941 = vsel %vm724, %v939, %v935
        %v942 = vld [vmem:[#allocation7] sm:$0xff]
        %v943 = vld [vmem:[#allocation7 + $0x8] sm:$0xff]
        %v944 = vld [vmem:[#allocation7 + $0x10] sm:$0xff]
        %v945 = vld [vmem:[#allocation7 + $0x18] sm:$0xff]
        %v946 = vld [vmem:[#allocation9] sm:$0xff]
        %v947 = vld [vmem:[#allocation9 + $0x8] sm:$0xff]
        %v948 = vld [vmem:[#allocation9 + $0x10] sm:$0xff]
        %v949 = vld [vmem:[#allocation9 + $0x18] sm:$0xff]
        %v950 = vld [vmem:[#allocation9 + $0x20] sm:$0xff]
        %v951 = vld [vmem:[#allocation9 + $0x28] sm:$0xff]
        %v952 = vld [vmem:[#allocation9 + $0x30] sm:$0xff]
        %v953 = vld [vmem:[#allocation9 + $0x38] sm:$0xff]
        %v954 = vld [vmem:[#allocation9 + $0x40] sm:$0xff]
        %v955 = vld [vmem:[#allocation9 + $0x48] sm:$0xff]
        %v956 = vld [vmem:[#allocation9 + $0x50] sm:$0xff]
        %v957 = vld [vmem:[#allocation9 + $0x58] sm:$0xff]
        %v958 = vld [vmem:[#allocation9 + $0x60] sm:$0xff]
        %v959 = vld [vmem:[#allocation9 + $0x68] sm:$0xff]
        %v960 = vld [vmem:[#allocation9 + $0x70] sm:$0xff]
        %v961 = vld [vmem:[#allocation9 + $0x78] sm:$0xff]
        %v962 = vld [vmem:[#allocation9 + $0x80] sm:$0xff]
        %v963 = vld [vmem:[#allocation9 + $0x88] sm:$0xff]
        %v964 = vld [vmem:[%s6] sm:$0x1]
        %v966 = vsel %vm727, %v920, 0
        %v969 = vsel %vm727, %v921, 0
        %v972 = vsel %vm727, %v940, 0
        %v975 = vsel %vm727, %v941, 0
        %977 = vmatpush.msra.mxu0 0.0
        %978 = vmatpush.msra.mxu0 0.0
        %979 = vmatpush.msra.mxu0 0.0
        %980 = vmatpush.msra.mxu0 0.0
        %981 = vmatpush.msra.mxu0 0.0
        %982 = vmatpush.msra.mxu0 0.0
        %983 = vmatpush.msra.mxu0 0.0
        %984 = vmatpush.msra.mxu0 0.0
        %985 = vmatpush.msra.mxu0 0.0
        %986 = vmatpush.msra.mxu0 0.0
        %987 = vmatpush.msra.mxu0 %v961
        %988 = vmatpush.msra.mxu0 %v958
        %989 = vmatpush.msra.mxu0 %v955
        %990 = vmatpush.msra.mxu0 %v952
        %991 = vmatpush.msra.mxu0 %v949
        %992 = vmatpush.msra.mxu0 %v946
        %993 = vmatmul.f32.gmra.mxu0 %v966
        %v994 = vpop.f32.mrf.mxu0
        %v995 = vadd.f32 0.0, %v994
        %996 = vmatmul.f32.gmra.mxu0 %v969
        %v997 = vpop.f32.mrf.mxu0
        %v998 = vadd.f32 0.0, %v997
        %999 = vmatmul.f32.gmra.mxu0 %v972
        %v1000 = vpop.f32.mrf.mxu0
        %v1001 = vadd.f32 0.0, %v1000
        %1002 = vmatmul.f32.gmra.mxu0 %v975
        %v1003 = vpop.f32.mrf.mxu0
        %v1004 = vadd.f32 0.0, %v1003
        %1005 = vdwg.mxu0
        %1006 = vmatpush.msra.mxu0 0.0
        %1007 = vmatpush.msra.mxu0 0.0
        %1008 = vmatpush.msra.mxu0 0.0
        %1009 = vmatpush.msra.mxu0 0.0
        %1010 = vmatpush.msra.mxu0 0.0
        %1011 = vmatpush.msra.mxu0 0.0
        %1012 = vmatpush.msra.mxu0 0.0
        %1013 = vmatpush.msra.mxu0 0.0
        %1014 = vmatpush.msra.mxu0 0.0
        %1015 = vmatpush.msra.mxu0 0.0
        %1016 = vmatpush.msra.mxu0 %v962
        %1017 = vmatpush.msra.mxu0 %v959
        %1018 = vmatpush.msra.mxu0 %v956
        %1019 = vmatpush.msra.mxu0 %v953
        %1020 = vmatpush.msra.mxu0 %v950
        %1021 = vmatpush.msra.mxu0 %v947
        %1022 = vmatmul.f32.gmra.mxu0 %v966
        %v1023 = vpop.f32.mrf.mxu0
        %v1024 = vadd.f32 0.0, %v1023
        %1025 = vmatmul.f32.gmra.mxu0 %v969
        %v1026 = vpop.f32.mrf.mxu0
        %v1027 = vadd.f32 0.0, %v1026
        %1028 = vmatmul.f32.gmra.mxu0 %v972
        %v1029 = vpop.f32.mrf.mxu0
        %v1030 = vadd.f32 0.0, %v1029
        %1031 = vmatmul.f32.gmra.mxu0 %v975
        %v1032 = vpop.f32.mrf.mxu0
        %v1033 = vadd.f32 0.0, %v1032
        %1034 = vdwg.mxu0
        %1035 = vmatpush.msra.mxu0 0.0
        %1036 = vmatpush.msra.mxu0 0.0
        %1037 = vmatpush.msra.mxu0 0.0
        %1038 = vmatpush.msra.mxu0 0.0
        %1039 = vmatpush.msra.mxu0 0.0
        %1040 = vmatpush.msra.mxu0 0.0
        %1041 = vmatpush.msra.mxu0 0.0
        %1042 = vmatpush.msra.mxu0 0.0
        %1043 = vmatpush.msra.mxu0 0.0
        %1044 = vmatpush.msra.mxu0 0.0
        %1045 = vmatpush.msra.mxu0 %v963
        %1046 = vmatpush.msra.mxu0 %v960
        %1047 = vmatpush.msra.mxu0 %v957
        %1048 = vmatpush.msra.mxu0 %v954
        %1049 = vmatpush.msra.mxu0 %v951
        %1050 = vmatpush.msra.mxu0 %v948
        %1051 = vmatmul.f32.gmra.mxu0 %v966
        %v1052 = vpop.f32.mrf.mxu0
        %v1053 = vadd.f32 0.0, %v1052
        %1054 = vmatmul.f32.gmra.mxu0 %v969
        %v1055 = vpop.f32.mrf.mxu0
        %v1056 = vadd.f32 0.0, %v1055
        %1057 = vmatmul.f32.gmra.mxu0 %v972
        %v1058 = vpop.f32.mrf.mxu0
        %v1059 = vadd.f32 0.0, %v1058
        %1060 = vmatmul.f32.gmra.mxu0 %v975
        %v1061 = vpop.f32.mrf.mxu0
        %v1062 = vadd.f32 0.0, %v1061
        %1063 = vdwg.mxu0
        %v1065 = vperm.slane %v964, 0
        %vm1067 = vcmask 785408
        %v1069 = vsel %vm1067, %v942, 0
        %v1072 = vsel %vm1067, %v943, 0
        %v1075 = vsel %vm1067, %v944, 0
        %v1078 = vsel %vm1067, %v945, 0
        %1080 = vmatpush.msra.mxu0 0.0
        %1081 = vmatpush.msra.mxu0 0.0
        %1082 = vmatpush.msra.mxu0 0.0
        %1083 = vmatpush.msra.mxu0 0.0
        %1084 = vmatpush.msra.mxu0 %v1062
        %1085 = vmatpush.msra.mxu0 %v1059
        %1086 = vmatpush.msra.mxu0 %v1056
        %1087 = vmatpush.msra.mxu0 %v1053
        %1088 = vmatpush.msra.mxu0 %v1033
        %1089 = vmatpush.msra.mxu0 %v1030
        %1090 = vmatpush.msra.mxu0 %v1027
        %1091 = vmatpush.msra.mxu0 %v1024
        %1092 = vmatpush.msra.mxu0 %v1004
        %1093 = vmatpush.msra.mxu0 %v1001
        %1094 = vmatpush.msra.mxu0 %v998
        %1095 = vmatpush.msra.mxu0 %v995
        %1096 = vmatmul.f32.gmra.mxu0 %v1069
        %v1097 = vpop.f32.mrf.mxu0
        %v1098 = vadd.f32 %v1065, %v1097
        %1099 = vmatmul.f32.gmra.mxu0 %v1072
        %v1100 = vpop.f32.mrf.mxu0
        %v1101 = vadd.f32 %v1065, %v1100
        %1102 = vmatmul.f32.gmra.mxu0 %v1075
        %v1103 = vpop.f32.mrf.mxu0
        %v1104 = vadd.f32 %v1065, %v1103
        %1105 = vmatmul.f32.gmra.mxu0 %v1078
        %v1106 = vpop.f32.mrf.mxu0
        %v1107 = vadd.f32 %v1065, %v1106
        %1108 = vdwg.mxu0
        %v1109 = vmax.f32 %v1098, 0.0
        %v1110 = vmax.f32 %v1101, 0.0
        %v1111 = vmax.f32 %v1104, 0.0
        %v1112 = vmax.f32 %v1107, 0.0
        %v1113 = vld [vmem:[#allocation10] sm:$0xff]
        %v1114 = vld [vmem:[#allocation10 + $0x8] sm:$0xff]
        %v1115 = vld [vmem:[#allocation10 + $0x10] sm:$0xff]
        %v1116 = vld [vmem:[#allocation10 + $0x18] sm:$0xff]
        %v1117 = vld [vmem:[#allocation10 + $0x20] sm:$0xff]
        %v1118 = vld [vmem:[#allocation10 + $0x28] sm:$0xff]
        %v1119 = vld [vmem:[#allocation10 + $0x30] sm:$0xff]
        %v1120 = vld [vmem:[#allocation10 + $0x38] sm:$0xff]
        %v1121 = vld [vmem:[#allocation10 + $0x40] sm:$0xff]
        %v1122 = vld [vmem:[#allocation10 + $0x48] sm:$0xff]
        %v1123 = vld [vmem:[#allocation10 + $0x50] sm:$0xff]
        %v1124 = vld [vmem:[#allocation10 + $0x58] sm:$0xff]
        %v1125 = vld [vmem:[#allocation10 + $0x60] sm:$0xff]
        %v1126 = vld [vmem:[#allocation10 + $0x68] sm:$0xff]
        %v1127 = vld [vmem:[#allocation10 + $0x70] sm:$0xff]
        %v1128 = vld [vmem:[#allocation10 + $0x78] sm:$0xff]
        %v1129 = vld [vmem:[#allocation10 + $0x80] sm:$0xff]
        %v1130 = vld [vmem:[#allocation10 + $0x88] sm:$0xff]
        %v1131 = vld [vmem:[#allocation10 + $0x90] sm:$0xff]
        %v1132 = vld [vmem:[#allocation10 + $0x98] sm:$0xff]
        %v1133 = vld [vmem:[#allocation10 + $0xa0] sm:$0xff]
        %v1134 = vld [vmem:[#allocation10 + $0xa8] sm:$0xff]
        %v1135 = vld [vmem:[#allocation10 + $0xb0] sm:$0xff]
        %v1136 = vld [vmem:[#allocation10 + $0xb8] sm:$0xff]
        %v1137 = vld [vmem:[#allocation10 + $0xc0] sm:$0xff]
        %v1138 = vld [vmem:[#allocation10 + $0xc8] sm:$0xff]
        %v1139 = vld [vmem:[#allocation10 + $0xd0] sm:$0xff]
        %v1140 = vld [vmem:[#allocation10 + $0xd8] sm:$0xff]
        %v1141 = vld [vmem:[#allocation10 + $0xe0] sm:$0xff]
        %v1142 = vld [vmem:[#allocation10 + $0xe8] sm:$0xff]
        %v1143 = vld [vmem:[#allocation10 + $0xf0] sm:$0xff]
        %v1144 = vld [vmem:[#allocation10 + $0xf8] sm:$0xff]
        %v1145 = vld [vmem:[#allocation10 + $0x100] sm:$0xff]
        %v1146 = vld [vmem:[#allocation10 + $0x108] sm:$0xff]
        %v1147 = vld [vmem:[#allocation10 + $0x110] sm:$0xff]
        %v1148 = vld [vmem:[#allocation10 + $0x118] sm:$0xff]
        %v1149 = vld [vmem:[#allocation10 + $0x120] sm:$0xff]
        %v1150 = vld [vmem:[#allocation10 + $0x128] sm:$0xff]
        %v1151 = vld [vmem:[#allocation10 + $0x130] sm:$0xff]
        %v1152 = vld [vmem:[#allocation10 + $0x138] sm:$0xff]
        %v1153 = vld [vmem:[#allocation10 + $0x140] sm:$0xff]
        %v1154 = vld [vmem:[#allocation10 + $0x148] sm:$0xff]
        %v1155 = vld [vmem:[#allocation10 + $0x150] sm:$0xff]
        %v1156 = vld [vmem:[#allocation10 + $0x158] sm:$0xff]
        %v1157 = vld [vmem:[#allocation10 + $0x160] sm:$0xff]
        %v1158 = vld [vmem:[#allocation10 + $0x168] sm:$0xff]
        %v1159 = vld [vmem:[#allocation10 + $0x170] sm:$0xff]
        %v1160 = vld [vmem:[#allocation10 + $0x178] sm:$0xff]
        %v1161 = vld [vmem:[#allocation10 + $0x180] sm:$0xff]
        %v1162 = vld [vmem:[#allocation10 + $0x188] sm:$0xff]
        %v1163 = vld [vmem:[#allocation10 + $0x190] sm:$0xff]
        %v1164 = vld [vmem:[#allocation10 + $0x198] sm:$0xff]
        %v1165 = vld [vmem:[#allocation10 + $0x1a0] sm:$0xff]
        %v1166 = vld [vmem:[#allocation10 + $0x1a8] sm:$0xff]
        %v1167 = vld [vmem:[#allocation10 + $0x1b0] sm:$0xff]
        %v1168 = vld [vmem:[#allocation10 + $0x1b8] sm:$0xff]
        %v1169 = vld [vmem:[#allocation10 + $0x1c0] sm:$0xff]
        %v1170 = vld [vmem:[#allocation10 + $0x1c8] sm:$0xff]
        %v1171 = vld [vmem:[#allocation10 + $0x1d0] sm:$0xff]
        %v1172 = vld [vmem:[#allocation10 + $0x1d8] sm:$0xff]
        %v1173 = vld [vmem:[#allocation10 + $0x1e0] sm:$0xff]
        %v1174 = vld [vmem:[#allocation10 + $0x1e8] sm:$0xff]
        %v1175 = vld [vmem:[#allocation10 + $0x1f0] sm:$0xff]
        %v1176 = vld [vmem:[#allocation10 + $0x1f8] sm:$0xff]
        %v1177 = vld [vmem:[#allocation10 + $0x200] sm:$0xff]
        %v1178 = vld [vmem:[#allocation10 + $0x208] sm:$0xff]
        %v1179 = vld [vmem:[#allocation10 + $0x210] sm:$0xff]
        %v1180 = vld [vmem:[#allocation10 + $0x218] sm:$0xff]
        %v1181 = vld [vmem:[#allocation10 + $0x220] sm:$0xff]
        %v1182 = vld [vmem:[#allocation10 + $0x228] sm:$0xff]
        %v1183 = vld [vmem:[#allocation10 + $0x230] sm:$0xff]
        %v1184 = vld [vmem:[#allocation10 + $0x238] sm:$0xff]
        %v1185 = vld [vmem:[#allocation10 + $0x240] sm:$0xff]
        %v1186 = vld [vmem:[#allocation10 + $0x248] sm:$0xff]
        %v1187 = vld [vmem:[#allocation10 + $0x250] sm:$0xff]
        %v1188 = vld [vmem:[#allocation10 + $0x258] sm:$0xff]
        %v1189 = vld [vmem:[#allocation10 + $0x260] sm:$0xff]
        %v1190 = vld [vmem:[#allocation10 + $0x268] sm:$0xff]
        %v1191 = vld [vmem:[#allocation10 + $0x270] sm:$0xff]
        %v1192 = vld [vmem:[#allocation10 + $0x278] sm:$0xff]
        %v1193 = vld [vmem:[#allocation10 + $0x280] sm:$0xff]
        %v1194 = vld [vmem:[#allocation10 + $0x288] sm:$0xff]
        %v1195 = vld [vmem:[#allocation10 + $0x290] sm:$0xff]
        %v1196 = vld [vmem:[#allocation10 + $0x298] sm:$0xff]
        %v1197 = vld [vmem:[#allocation10 + $0x2a0] sm:$0xff]
        %v1198 = vld [vmem:[#allocation10 + $0x2a8] sm:$0xff]
        %v1199 = vld [vmem:[#allocation10 + $0x2b0] sm:$0xff]
        %v1200 = vld [vmem:[#allocation10 + $0x2b8] sm:$0xff]
        %v1201 = vld [vmem:[#allocation10 + $0x2c0] sm:$0xff]
        %v1202 = vld [vmem:[#allocation10 + $0x2c8] sm:$0xff]
        %v1203 = vld [vmem:[#allocation10 + $0x2d0] sm:$0xff]
        %v1204 = vld [vmem:[#allocation10 + $0x2d8] sm:$0xff]
        %v1205 = vld [vmem:[#allocation10 + $0x2e0] sm:$0xff]
        %v1206 = vld [vmem:[#allocation10 + $0x2e8] sm:$0xff]
        %v1207 = vld [vmem:[#allocation10 + $0x2f0] sm:$0xff]
        %v1208 = vld [vmem:[#allocation10 + $0x2f8] sm:$0xff]
        %v1209 = vld [vmem:[%s8] sm:$0x3]
        %1210 = vmatpush.msra.mxu0 %v1203
        %1211 = vmatpush.msra.mxu0 %v1197
        %1212 = vmatpush.msra.mxu0 %v1191
        %1213 = vmatpush.msra.mxu0 %v1185
        %1214 = vmatpush.msra.mxu0 %v1179
        %1215 = vmatpush.msra.mxu0 %v1173
        %1216 = vmatpush.msra.mxu0 %v1167
        %1217 = vmatpush.msra.mxu0 %v1161
        %1218 = vmatpush.msra.mxu0 %v1155
        %1219 = vmatpush.msra.mxu0 %v1149
        %1220 = vmatpush.msra.mxu0 %v1143
        %1221 = vmatpush.msra.mxu0 %v1137
        %1222 = vmatpush.msra.mxu0 %v1131
        %1223 = vmatpush.msra.mxu0 %v1125
        %1224 = vmatpush.msra.mxu0 %v1119
        %1225 = vmatpush.msra.mxu0 %v1113
        %1226 = vmatmul.f32.gmra.mxu0 %v1109
        %v1227 = vpop.f32.mrf.mxu0
        %v1228 = vadd.f32 0.0, %v1227
        %1229 = vmatmul.f32.gmra.mxu0 %v1110
        %v1230 = vpop.f32.mrf.mxu0
        %v1231 = vadd.f32 0.0, %v1230
        %1232 = vmatmul.f32.gmra.mxu0 %v1111
        %v1233 = vpop.f32.mrf.mxu0
        %v1234 = vadd.f32 0.0, %v1233
        %1235 = vmatmul.f32.gmra.mxu0 %v1112
        %v1236 = vpop.f32.mrf.mxu0
        %v1237 = vadd.f32 0.0, %v1236
        %1238 = vdwg.mxu0
        %1239 = vmatpush.msra.mxu0 %v1204
        %1240 = vmatpush.msra.mxu0 %v1198
        %1241 = vmatpush.msra.mxu0 %v1192
        %1242 = vmatpush.msra.mxu0 %v1186
        %1243 = vmatpush.msra.mxu0 %v1180
        %1244 = vmatpush.msra.mxu0 %v1174
        %1245 = vmatpush.msra.mxu0 %v1168
        %1246 = vmatpush.msra.mxu0 %v1162
        %1247 = vmatpush.msra.mxu0 %v1156
        %1248 = vmatpush.msra.mxu0 %v1150
        %1249 = vmatpush.msra.mxu0 %v1144
        %1250 = vmatpush.msra.mxu0 %v1138
        %1251 = vmatpush.msra.mxu0 %v1132
        %1252 = vmatpush.msra.mxu0 %v1126
        %1253 = vmatpush.msra.mxu0 %v1120
        %1254 = vmatpush.msra.mxu0 %v1114
        %1255 = vmatmul.f32.gmra.mxu0 %v1109
        %v1256 = vpop.f32.mrf.mxu0
        %v1257 = vadd.f32 0.0, %v1256
        %1258 = vmatmul.f32.gmra.mxu0 %v1110
        %v1259 = vpop.f32.mrf.mxu0
        %v1260 = vadd.f32 0.0, %v1259
        %1261 = vmatmul.f32.gmra.mxu0 %v1111
        %v1262 = vpop.f32.mrf.mxu0
        %v1263 = vadd.f32 0.0, %v1262
        %1264 = vmatmul.f32.gmra.mxu0 %v1112
        %v1265 = vpop.f32.mrf.mxu0
        %v1266 = vadd.f32 0.0, %v1265
        %1267 = vdwg.mxu0
        %1268 = vmatpush.msra.mxu0 %v1205
        %1269 = vmatpush.msra.mxu0 %v1199
        %1270 = vmatpush.msra.mxu0 %v1193
        %1271 = vmatpush.msra.mxu0 %v1187
        %1272 = vmatpush.msra.mxu0 %v1181
        %1273 = vmatpush.msra.mxu0 %v1175
        %1274 = vmatpush.msra.mxu0 %v1169
        %1275 = vmatpush.msra.mxu0 %v1163
        %1276 = vmatpush.msra.mxu0 %v1157
        %1277 = vmatpush.msra.mxu0 %v1151
        %1278 = vmatpush.msra.mxu0 %v1145
        %1279 = vmatpush.msra.mxu0 %v1139
        %1280 = vmatpush.msra.mxu0 %v1133
        %1281 = vmatpush.msra.mxu0 %v1127
        %1282 = vmatpush.msra.mxu0 %v1121
        %1283 = vmatpush.msra.mxu0 %v1115
        %1284 = vmatmul.f32.gmra.mxu0 %v1109
        %v1285 = vpop.f32.mrf.mxu0
        %v1286 = vadd.f32 0.0, %v1285
        %1287 = vmatmul.f32.gmra.mxu0 %v1110
        %v1288 = vpop.f32.mrf.mxu0
        %v1289 = vadd.f32 0.0, %v1288
        %1290 = vmatmul.f32.gmra.mxu0 %v1111
        %v1291 = vpop.f32.mrf.mxu0
        %v1292 = vadd.f32 0.0, %v1291
        %1293 = vmatmul.f32.gmra.mxu0 %v1112
        %v1294 = vpop.f32.mrf.mxu0
        %v1295 = vadd.f32 0.0, %v1294
        %1296 = vdwg.mxu0
        %1297 = vmatpush.msra.mxu0 %v1206
        %1298 = vmatpush.msra.mxu0 %v1200
        %1299 = vmatpush.msra.mxu0 %v1194
        %1300 = vmatpush.msra.mxu0 %v1188
        %1301 = vmatpush.msra.mxu0 %v1182
        %1302 = vmatpush.msra.mxu0 %v1176
        %1303 = vmatpush.msra.mxu0 %v1170
        %1304 = vmatpush.msra.mxu0 %v1164
        %1305 = vmatpush.msra.mxu0 %v1158
        %1306 = vmatpush.msra.mxu0 %v1152
        %1307 = vmatpush.msra.mxu0 %v1146
        %1308 = vmatpush.msra.mxu0 %v1140
        %1309 = vmatpush.msra.mxu0 %v1134
        %1310 = vmatpush.msra.mxu0 %v1128
        %1311 = vmatpush.msra.mxu0 %v1122
        %1312 = vmatpush.msra.mxu0 %v1116
        %1313 = vmatmul.f32.gmra.mxu0 %v1109
        %v1314 = vpop.f32.mrf.mxu0
        %v1315 = vadd.f32 0.0, %v1314
        %1316 = vmatmul.f32.gmra.mxu0 %v1110
        %v1317 = vpop.f32.mrf.mxu0
        %v1318 = vadd.f32 0.0, %v1317
        %1319 = vmatmul.f32.gmra.mxu0 %v1111
        %v1320 = vpop.f32.mrf.mxu0
        %v1321 = vadd.f32 0.0, %v1320
        %1322 = vmatmul.f32.gmra.mxu0 %v1112
        %v1323 = vpop.f32.mrf.mxu0
        %v1324 = vadd.f32 0.0, %v1323
        %1325 = vdwg.mxu0
        %1326 = vmatpush.msra.mxu0 %v1207
        %1327 = vmatpush.msra.mxu0 %v1201
        %1328 = vmatpush.msra.mxu0 %v1195
        %1329 = vmatpush.msra.mxu0 %v1189
        %1330 = vmatpush.msra.mxu0 %v1183
        %1331 = vmatpush.msra.mxu0 %v1177
        %1332 = vmatpush.msra.mxu0 %v1171
        %1333 = vmatpush.msra.mxu0 %v1165
        %1334 = vmatpush.msra.mxu0 %v1159
        %1335 = vmatpush.msra.mxu0 %v1153
        %1336 = vmatpush.msra.mxu0 %v1147
        %1337 = vmatpush.msra.mxu0 %v1141
        %1338 = vmatpush.msra.mxu0 %v1135
        %1339 = vmatpush.msra.mxu0 %v1129
        %1340 = vmatpush.msra.mxu0 %v1123
        %1341 = vmatpush.msra.mxu0 %v1117
        %1342 = vmatmul.f32.gmra.mxu0 %v1109
        %v1343 = vpop.f32.mrf.mxu0
        %v1344 = vadd.f32 0.0, %v1343
        %1345 = vmatmul.f32.gmra.mxu0 %v1110
        %v1346 = vpop.f32.mrf.mxu0
        %v1347 = vadd.f32 0.0, %v1346
        %1348 = vmatmul.f32.gmra.mxu0 %v1111
        %v1349 = vpop.f32.mrf.mxu0
        %v1350 = vadd.f32 0.0, %v1349
        %1351 = vmatmul.f32.gmra.mxu0 %v1112
        %v1352 = vpop.f32.mrf.mxu0
        %v1353 = vadd.f32 0.0, %v1352
        %1354 = vdwg.mxu0
        %1355 = vmatpush.msra.mxu0 %v1208
        %1356 = vmatpush.msra.mxu0 %v1202
        %1357 = vmatpush.msra.mxu0 %v1196
        %1358 = vmatpush.msra.mxu0 %v1190
        %1359 = vmatpush.msra.mxu0 %v1184
        %1360 = vmatpush.msra.mxu0 %v1178
        %1361 = vmatpush.msra.mxu0 %v1172
        %1362 = vmatpush.msra.mxu0 %v1166
        %1363 = vmatpush.msra.mxu0 %v1160
        %1364 = vmatpush.msra.mxu0 %v1154
        %1365 = vmatpush.msra.mxu0 %v1148
        %1366 = vmatpush.msra.mxu0 %v1142
        %1367 = vmatpush.msra.mxu0 %v1136
        %1368 = vmatpush.msra.mxu0 %v1130
        %1369 = vmatpush.msra.mxu0 %v1124
        %1370 = vmatpush.msra.mxu0 %v1118
        %1371 = vmatmul.f32.gmra.mxu0 %v1109
        %v1372 = vpop.f32.mrf.mxu0
        %v1373 = vadd.f32 0.0, %v1372
        %1374 = vmatmul.f32.gmra.mxu0 %v1110
        %v1375 = vpop.f32.mrf.mxu0
        %v1376 = vadd.f32 0.0, %v1375
        %1377 = vmatmul.f32.gmra.mxu0 %v1111
        %v1378 = vpop.f32.mrf.mxu0
        %v1379 = vadd.f32 0.0, %v1378
        %1380 = vmatmul.f32.gmra.mxu0 %v1112
        %v1381 = vpop.f32.mrf.mxu0
        %v1382 = vadd.f32 0.0, %v1381
        %1383 = vdwg.mxu0
        %v1385 = vperm.slane %v1209, 0
        %v1386 = vperm.slane %v1209, 1
        %1389 = vmatpush.msra.mxu0 0.0
        %1390 = vmatpush.msra.mxu0 0.0
        %1391 = vmatpush.msra.mxu0 0.0
        %1392 = vmatpush.msra.mxu0 0.0
        %1393 = vmatpush.msra.mxu0 %v1353
        %1394 = vmatpush.msra.mxu0 %v1350
        %1395 = vmatpush.msra.mxu0 %v1347
        %1396 = vmatpush.msra.mxu0 %v1344
        %1397 = vmatpush.msra.mxu0 %v1295
        %1398 = vmatpush.msra.mxu0 %v1292
        %1399 = vmatpush.msra.mxu0 %v1289
        %1400 = vmatpush.msra.mxu0 %v1286
        %1401 = vmatpush.msra.mxu0 %v1237
        %1402 = vmatpush.msra.mxu0 %v1234
        %1403 = vmatpush.msra.mxu0 %v1231
        %1404 = vmatpush.msra.mxu0 %v1228
        %1405 = vmatmul.f32.gmra.mxu0 %v1069
        %v1406 = vpop.f32.mrf.mxu0
        %v1407 = vadd.f32 %v1385, %v1406
        %1408 = vmatmul.f32.gmra.mxu0 %v1072
        %v1409 = vpop.f32.mrf.mxu0
        %v1410 = vadd.f32 %v1385, %v1409
        %1411 = vmatmul.f32.gmra.mxu0 %v1075
        %v1412 = vpop.f32.mrf.mxu0
        %v1413 = vadd.f32 %v1385, %v1412
        %1414 = vmatmul.f32.gmra.mxu0 %v1078
        %v1415 = vpop.f32.mrf.mxu0
        %v1416 = vadd.f32 %v1385, %v1415
        %1417 = vdwg.mxu0
        %1418 = vmatpush.msra.mxu0 0.0
        %1419 = vmatpush.msra.mxu0 0.0
        %1420 = vmatpush.msra.mxu0 0.0
        %1421 = vmatpush.msra.mxu0 0.0
        %1422 = vmatpush.msra.mxu0 %v1382
        %1423 = vmatpush.msra.mxu0 %v1379
        %1424 = vmatpush.msra.mxu0 %v1376
        %1425 = vmatpush.msra.mxu0 %v1373
        %1426 = vmatpush.msra.mxu0 %v1324
        %1427 = vmatpush.msra.mxu0 %v1321
        %1428 = vmatpush.msra.mxu0 %v1318
        %1429 = vmatpush.msra.mxu0 %v1315
        %1430 = vmatpush.msra.mxu0 %v1266
        %1431 = vmatpush.msra.mxu0 %v1263
        %1432 = vmatpush.msra.mxu0 %v1260
        %1433 = vmatpush.msra.mxu0 %v1257
        %1434 = vmatmul.f32.gmra.mxu0 %v1069
        %v1435 = vpop.f32.mrf.mxu0
        %v1436 = vadd.f32 %v1386, %v1435
        %1437 = vmatmul.f32.gmra.mxu0 %v1072
        %v1438 = vpop.f32.mrf.mxu0
        %v1439 = vadd.f32 %v1386, %v1438
        %1440 = vmatmul.f32.gmra.mxu0 %v1075
        %v1441 = vpop.f32.mrf.mxu0
        %v1442 = vadd.f32 %v1386, %v1441
        %1443 = vmatmul.f32.gmra.mxu0 %v1078
        %v1444 = vpop.f32.mrf.mxu0
        %v1445 = vadd.f32 %v1386, %v1444
        %1446 = vdwg.mxu0
        %v1447 = vmax.f32 %v1407, 0.0
        %v1448 = vmax.f32 %v1436, 0.0
        %v1449 = vmax.f32 %v1410, 0.0
        %v1450 = vmax.f32 %v1439, 0.0
        %v1451 = vmax.f32 %v1413, 0.0
        %v1452 = vmax.f32 %v1442, 0.0
        %v1453 = vmax.f32 %v1416, 0.0
        %v1454 = vmax.f32 %v1445, 0.0
        %v1455 = vld [vmem:[%s9] sm:$0x1]
        %v1456 = vmul.f32 %v1109, %v1109
        %v1457 = vmul.f32 %v1110, %v1110
        %v1458 = vadd.f32 %v1456, 0.0
        %v1459 = vadd.f32 %v1457, 0.0
        %v1460 = vmul.f32 %v1111, %v1111
        %v1461 = vmul.f32 %v1112, %v1112
        %v1462 = vadd.f32 %v1460, 0.0
        %v1463 = vadd.f32 %v1461, 0.0
        %1466 = vrot.lane.b32.xlu0 %v1456, 112
        %v1467 = vpop.permute.xlu0 %1466
        %1468 = vrot.lane.b32.xlu0 %v1457, 112
        %v1469 = vpop.permute.xlu0 %1468
        %v1472 = vadd.f32 %v1458, %v1467
        %v1473 = vadd.f32 %v1459, %v1469
        %1476 = vrot.lane.b32.xlu0 %v1460, 112
        %v1477 = vpop.permute.xlu0 %1476
        %1478 = vrot.lane.b32.xlu0 %v1461, 112
        %v1479 = vpop.permute.xlu0 %1478
        %v1482 = vadd.f32 %v1462, %v1477
        %v1483 = vadd.f32 %v1463, %v1479
        %1484 = vrot.lane.b32.xlu0 %v1456, 96
        %v1485 = vpop.permute.xlu0 %1484
        %1486 = vrot.lane.b32.xlu0 %v1457, 96
        %v1487 = vpop.permute.xlu0 %1486
        %v1490 = vadd.f32 %v1472, %v1485
        %v1491 = vadd.f32 %v1473, %v1487
        %1492 = vrot.lane.b32.xlu0 %v1460, 96
        %v1493 = vpop.permute.xlu0 %1492
        %1494 = vrot.lane.b32.xlu0 %v1461, 96
        %v1495 = vpop.permute.xlu0 %1494
        %v1498 = vadd.f32 %v1482, %v1493
        %v1499 = vadd.f32 %v1483, %v1495
        %1500 = vrot.lane.b32.xlu0 %v1456, 80
        %v1501 = vpop.permute.xlu0 %1500
        %1502 = vrot.lane.b32.xlu0 %v1457, 80
        %v1503 = vpop.permute.xlu0 %1502
        %v1506 = vadd.f32 %v1490, %v1501
        %v1507 = vadd.f32 %v1491, %v1503
        %1508 = vrot.lane.b32.xlu0 %v1460, 80
        %v1509 = vpop.permute.xlu0 %1508
        %1510 = vrot.lane.b32.xlu0 %v1461, 80
        %v1511 = vpop.permute.xlu0 %1510
        %v1514 = vadd.f32 %v1498, %v1509
        %v1515 = vadd.f32 %v1499, %v1511
        %1516 = vrot.lane.b32.xlu0 %v1456, 64
        %v1517 = vpop.permute.xlu0 %1516
        %1518 = vrot.lane.b32.xlu0 %v1457, 64
        %v1519 = vpop.permute.xlu0 %1518
        %v1522 = vadd.f32 %v1506, %v1517
        %v1523 = vadd.f32 %v1507, %v1519
        %1524 = vrot.lane.b32.xlu0 %v1460, 64
        %v1525 = vpop.permute.xlu0 %1524
        %1526 = vrot.lane.b32.xlu0 %v1461, 64
        %v1527 = vpop.permute.xlu0 %1526
        %v1530 = vadd.f32 %v1514, %v1525
        %v1531 = vadd.f32 %v1515, %v1527
        %1532 = vrot.lane.b32.xlu0 %v1456, 48
        %v1533 = vpop.permute.xlu0 %1532
        %1534 = vrot.lane.b32.xlu0 %v1457, 48
        %v1535 = vpop.permute.xlu0 %1534
        %v1538 = vadd.f32 %v1522, %v1533
        %v1539 = vadd.f32 %v1523, %v1535
        %1540 = vrot.lane.b32.xlu0 %v1460, 48
        %v1541 = vpop.permute.xlu0 %1540
        %1542 = vrot.lane.b32.xlu0 %v1461, 48
        %v1543 = vpop.permute.xlu0 %1542
        %v1546 = vadd.f32 %v1530, %v1541
        %v1547 = vadd.f32 %v1531, %v1543
        %1548 = vrot.lane.b32.xlu0 %v1456, 32
        %v1549 = vpop.permute.xlu0 %1548
        %1550 = vrot.lane.b32.xlu0 %v1457, 32
        %v1551 = vpop.permute.xlu0 %1550
        %v1554 = vadd.f32 %v1538, %v1549
        %v1555 = vadd.f32 %v1539, %v1551
        %1556 = vrot.lane.b32.xlu0 %v1460, 32
        %v1557 = vpop.permute.xlu0 %1556
        %1558 = vrot.lane.b32.xlu0 %v1461, 32
        %v1559 = vpop.permute.xlu0 %1558
        %v1562 = vadd.f32 %v1546, %v1557
        %v1563 = vadd.f32 %v1547, %v1559
        %1564 = vrot.lane.b32.xlu0 %v1456, 16
        %v1565 = vpop.permute.xlu0 %1564
        %1566 = vrot.lane.b32.xlu0 %v1457, 16
        %v1567 = vpop.permute.xlu0 %1566
        %v1570 = vadd.f32 %v1554, %v1565
        %v1571 = vadd.f32 %v1555, %v1567
        %1572 = vrot.lane.b32.xlu0 %v1460, 16
        %v1573 = vpop.permute.xlu0 %1572
        %1574 = vrot.lane.b32.xlu0 %v1461, 16
        %v1575 = vpop.permute.xlu0 %1574
        %v1578 = vadd.f32 %v1562, %v1573
        %v1579 = vadd.f32 %v1563, %v1575
        %v1580 = vadd.f32 %v1570, 1e-10
        %v1581 = vadd.f32 %v1571, 1e-10
        %v1582 = vrsqrt.pop %v1580
        %v1583 = vmul.f32 %v1582, %v1580
        %v1584 = vmul.f32 %v1583, %v1582
        %v1585 = vmul.f32 0.5, %v1584
        %v1586 = vsub.f32 1.5, %v1585
        %v1587 = vmul.f32 %v1582, %v1586
        %vm1588 = vweird.f32 %v1580
        %vm1589 = vweird.f32 %v1582
        %vm1590 = vmor %vm1588, %vm1589
        %v1591 = vsel %vm1590, %v1582, %v1587
        %v1592 = vrsqrt.pop %v1581
        %v1593 = vmul.f32 %v1592, %v1581
        %v1594 = vmul.f32 %v1593, %v1592
        %v1595 = vmul.f32 0.5, %v1594
        %v1596 = vsub.f32 1.5, %v1595
        %v1597 = vmul.f32 %v1592, %v1596
        %vm1598 = vweird.f32 %v1581
        %vm1599 = vweird.f32 %v1592
        %vm1600 = vmor %vm1598, %vm1599
        %v1601 = vsel %vm1600, %v1592, %v1597
        %1604 = vrot.lane.b32.xlu0 %v1591, 16
        %v1605 = vpop.permute.xlu0 %1604
        %1606 = vrot.lane.b32.xlu0 %v1601, 16
        %v1607 = vpop.permute.xlu0 %1606
        %1610 = vrot.lane.b32.xlu0 %v1591, 32
        %v1611 = vpop.permute.xlu0 %1610
        %1612 = vrot.lane.b32.xlu0 %v1601, 32
        %v1613 = vpop.permute.xlu0 %1612
        %1616 = vrot.lane.b32.xlu0 %v1591, 48
        %v1617 = vpop.permute.xlu0 %1616
        %1618 = vrot.lane.b32.xlu0 %v1601, 48
        %v1619 = vpop.permute.xlu0 %1618
        %1622 = vrot.lane.b32.xlu0 %v1591, 64
        %v1623 = vpop.permute.xlu0 %1622
        %1624 = vrot.lane.b32.xlu0 %v1601, 64
        %v1625 = vpop.permute.xlu0 %1624
        %1628 = vrot.lane.b32.xlu0 %v1591, 80
        %v1629 = vpop.permute.xlu0 %1628
        %1630 = vrot.lane.b32.xlu0 %v1601, 80
        %v1631 = vpop.permute.xlu0 %1630
        %1634 = vrot.lane.b32.xlu0 %v1591, 96
        %v1635 = vpop.permute.xlu0 %1634
        %1636 = vrot.lane.b32.xlu0 %v1601, 96
        %v1637 = vpop.permute.xlu0 %1636
        %1640 = vrot.lane.b32.xlu0 %v1591, 112
        %v1641 = vpop.permute.xlu0 %1640
        %1642 = vrot.lane.b32.xlu0 %v1601, 112
        %v1643 = vpop.permute.xlu0 %1642
        %v1646 = vsel %vm604, %v1591, %v1605
        %v1647 = vsel %vm604, %v1601, %v1607
        %v1648 = vsel %vm724, %v1646, %v1611
        %v1649 = vsel %vm724, %v1647, %v1613
        %v1650 = vsel %vm727, %v1648, %v1617
        %v1651 = vsel %vm727, %v1649, %v1619
        %v1652 = vsel %vm730, %v1650, %v1623
        %v1653 = vsel %vm730, %v1651, %v1625
        %vm1654 = vcmask 654336
        %v1655 = vsel %vm1654, %v1652, %v1629
        %v1656 = vsel %vm1654, %v1653, %v1631
        %v1657 = vsel %vm1067, %v1655, %v1635
        %v1658 = vsel %vm1067, %v1656, %v1637
        %vm1659 = vcmask 916480
        %v1660 = vsel %vm1659, %v1657, %v1641
        %v1661 = vsel %vm1659, %v1658, %v1643
        %v1662 = vadd.f32 %v1578, 1e-10
        %v1663 = vadd.f32 %v1579, 1e-10
        %v1664 = vrsqrt.pop %v1662
        %v1665 = vmul.f32 %v1664, %v1662
        %v1666 = vmul.f32 %v1665, %v1664
        %v1667 = vmul.f32 0.5, %v1666
        %v1668 = vsub.f32 1.5, %v1667
        %v1669 = vmul.f32 %v1664, %v1668
        %vm1670 = vweird.f32 %v1662
        %vm1671 = vweird.f32 %v1664
        %vm1672 = vmor %vm1670, %vm1671
        %v1673 = vsel %vm1672, %v1664, %v1669
        %v1674 = vrsqrt.pop %v1663
        %v1675 = vmul.f32 %v1674, %v1663
        %v1676 = vmul.f32 %v1675, %v1674
        %v1677 = vmul.f32 0.5, %v1676
        %v1678 = vsub.f32 1.5, %v1677
        %v1679 = vmul.f32 %v1674, %v1678
        %vm1680 = vweird.f32 %v1663
        %vm1681 = vweird.f32 %v1674
        %vm1682 = vmor %vm1680, %vm1681
        %v1683 = vsel %vm1682, %v1674, %v1679
        %1686 = vrot.lane.b32.xlu0 %v1673, 16
        %v1687 = vpop.permute.xlu0 %1686
        %1688 = vrot.lane.b32.xlu0 %v1683, 16
        %v1689 = vpop.permute.xlu0 %1688
        %1692 = vrot.lane.b32.xlu0 %v1673, 32
        %v1693 = vpop.permute.xlu0 %1692
        %1694 = vrot.lane.b32.xlu0 %v1683, 32
        %v1695 = vpop.permute.xlu0 %1694
        %1698 = vrot.lane.b32.xlu0 %v1673, 48
        %v1699 = vpop.permute.xlu0 %1698
        %1700 = vrot.lane.b32.xlu0 %v1683, 48
        %v1701 = vpop.permute.xlu0 %1700
        %1704 = vrot.lane.b32.xlu0 %v1673, 64
        %v1705 = vpop.permute.xlu0 %1704
        %1706 = vrot.lane.b32.xlu0 %v1683, 64
        %v1707 = vpop.permute.xlu0 %1706
        %1710 = vrot.lane.b32.xlu0 %v1673, 80
        %v1711 = vpop.permute.xlu0 %1710
        %1712 = vrot.lane.b32.xlu0 %v1683, 80
        %v1713 = vpop.permute.xlu0 %1712
        %1716 = vrot.lane.b32.xlu0 %v1673, 96
        %v1717 = vpop.permute.xlu0 %1716
        %1718 = vrot.lane.b32.xlu0 %v1683, 96
        %v1719 = vpop.permute.xlu0 %1718
        %1722 = vrot.lane.b32.xlu0 %v1673, 112
        %v1723 = vpop.permute.xlu0 %1722
        %1724 = vrot.lane.b32.xlu0 %v1683, 112
        %v1725 = vpop.permute.xlu0 %1724
        %v1728 = vsel %vm604, %v1673, %v1687
        %v1729 = vsel %vm604, %v1683, %v1689
        %v1730 = vsel %vm724, %v1728, %v1693
        %v1731 = vsel %vm724, %v1729, %v1695
        %v1732 = vsel %vm727, %v1730, %v1699
        %v1733 = vsel %vm727, %v1731, %v1701
        %v1734 = vsel %vm730, %v1732, %v1705
        %v1735 = vsel %vm730, %v1733, %v1707
        %v1736 = vsel %vm1654, %v1734, %v1711
        %v1737 = vsel %vm1654, %v1735, %v1713
        %v1738 = vsel %vm1067, %v1736, %v1717
        %v1739 = vsel %vm1067, %v1737, %v1719
        %v1740 = vsel %vm1659, %v1738, %v1723
        %v1741 = vsel %vm1659, %v1739, %v1725
        %v1742 = vmul.f32 %v1109, %v1660
        %v1743 = vmul.f32 %v1110, %v1661
        %v1744 = vmul.f32 %v1111, %v1740
        %v1745 = vmul.f32 %v1112, %v1741
        %v1746 = vsub.f32 %v1742, %v1744
        %v1747 = vsub.f32 %v1743, %v1745
        %v1748 = vmul.f32 %v1746, %v1746
        %v1749 = vmul.f32 %v1747, %v1747
        %v1751 = vperm.slane %v1455, 0
        %v1753 = vmul.f32 %v1748, %v1751
        %v1754 = vmul.f32 %v1749, %v1751
        %v1755 = vadd.f32 %v1753, %v1754
        %1756 = vadd.xlane.f32.xlu0 %v1755
        %v1757 = vpop.xlane.xlu0 %1756
        %v1758 = vrot.slane %v1757, 4
        %v1759 = vadd.f32 %v1757, %v1758
        %v1760 = vrot.slane %v1759, 2
        %v1761 = vadd.f32 %v1759, %v1760
        %v1762 = vrot.slane %v1761, 1
        %v1763 = vadd.f32 %v1761, %v1762
        %s1764 = vtos %v1763
        %v1765 = vstv %s1764
        %v1766 = vmul.f32 %v1765, 0.00390625
        %v1767 = vld [vmem:[%s10] sm:$0x3]
        %v1768 = vmul.f32 %v1447, %v1447
        %v1769 = vmul.f32 %v1449, %v1449
        %v1770 = vadd.f32 %v1768, 0.0
        %v1771 = vadd.f32 %v1769, 0.0
        %v1772 = vmul.f32 %v1451, %v1451
        %v1773 = vmul.f32 %v1453, %v1453
        %v1774 = vadd.f32 %v1772, 0.0
        %v1775 = vadd.f32 %v1773, 0.0
        %1778 = vrot.lane.b32.xlu0 %v1768, 112
        %v1779 = vpop.permute.xlu0 %1778
        %1780 = vrot.lane.b32.xlu0 %v1769, 112
        %v1781 = vpop.permute.xlu0 %1780
        %v1784 = vadd.f32 %v1770, %v1779
        %v1785 = vadd.f32 %v1771, %v1781
        %1788 = vrot.lane.b32.xlu0 %v1772, 112
        %v1789 = vpop.permute.xlu0 %1788
        %1790 = vrot.lane.b32.xlu0 %v1773, 112
        %v1791 = vpop.permute.xlu0 %1790
        %v1794 = vadd.f32 %v1774, %v1789
        %v1795 = vadd.f32 %v1775, %v1791
        %1796 = vrot.lane.b32.xlu0 %v1768, 96
        %v1797 = vpop.permute.xlu0 %1796
        %1798 = vrot.lane.b32.xlu0 %v1769, 96
        %v1799 = vpop.permute.xlu0 %1798
        %v1802 = vadd.f32 %v1784, %v1797
        %v1803 = vadd.f32 %v1785, %v1799
        %1804 = vrot.lane.b32.xlu0 %v1772, 96
        %v1805 = vpop.permute.xlu0 %1804
        %1806 = vrot.lane.b32.xlu0 %v1773, 96
        %v1807 = vpop.permute.xlu0 %1806
        %v1810 = vadd.f32 %v1794, %v1805
        %v1811 = vadd.f32 %v1795, %v1807
        %1812 = vrot.lane.b32.xlu0 %v1768, 80
        %v1813 = vpop.permute.xlu0 %1812
        %1814 = vrot.lane.b32.xlu0 %v1769, 80
        %v1815 = vpop.permute.xlu0 %1814
        %v1818 = vadd.f32 %v1802, %v1813
        %v1819 = vadd.f32 %v1803, %v1815
        %1820 = vrot.lane.b32.xlu0 %v1772, 80
        %v1821 = vpop.permute.xlu0 %1820
        %1822 = vrot.lane.b32.xlu0 %v1773, 80
        %v1823 = vpop.permute.xlu0 %1822
        %v1826 = vadd.f32 %v1810, %v1821
        %v1827 = vadd.f32 %v1811, %v1823
        %1828 = vrot.lane.b32.xlu0 %v1768, 64
        %v1829 = vpop.permute.xlu0 %1828
        %1830 = vrot.lane.b32.xlu0 %v1769, 64
        %v1831 = vpop.permute.xlu0 %1830
        %v1834 = vadd.f32 %v1818, %v1829
        %v1835 = vadd.f32 %v1819, %v1831
        %1836 = vrot.lane.b32.xlu0 %v1772, 64
        %v1837 = vpop.permute.xlu0 %1836
        %1838 = vrot.lane.b32.xlu0 %v1773, 64
        %v1839 = vpop.permute.xlu0 %1838
        %v1842 = vadd.f32 %v1826, %v1837
        %v1843 = vadd.f32 %v1827, %v1839
        %1844 = vrot.lane.b32.xlu0 %v1768, 48
        %v1845 = vpop.permute.xlu0 %1844
        %1846 = vrot.lane.b32.xlu0 %v1769, 48
        %v1847 = vpop.permute.xlu0 %1846
        %v1850 = vadd.f32 %v1834, %v1845
        %v1851 = vadd.f32 %v1835, %v1847
        %1852 = vrot.lane.b32.xlu0 %v1772, 48
        %v1853 = vpop.permute.xlu0 %1852
        %1854 = vrot.lane.b32.xlu0 %v1773, 48
        %v1855 = vpop.permute.xlu0 %1854
        %v1858 = vadd.f32 %v1842, %v1853
        %v1859 = vadd.f32 %v1843, %v1855
        %1860 = vrot.lane.b32.xlu0 %v1768, 32
        %v1861 = vpop.permute.xlu0 %1860
        %1862 = vrot.lane.b32.xlu0 %v1769, 32
        %v1863 = vpop.permute.xlu0 %1862
        %v1866 = vadd.f32 %v1850, %v1861
        %v1867 = vadd.f32 %v1851, %v1863
        %1868 = vrot.lane.b32.xlu0 %v1772, 32
        %v1869 = vpop.permute.xlu0 %1868
        %1870 = vrot.lane.b32.xlu0 %v1773, 32
        %v1871 = vpop.permute.xlu0 %1870
        %v1874 = vadd.f32 %v1858, %v1869
        %v1875 = vadd.f32 %v1859, %v1871
        %1876 = vrot.lane.b32.xlu0 %v1768, 16
        %v1877 = vpop.permute.xlu0 %1876
        %1878 = vrot.lane.b32.xlu0 %v1769, 16
        %v1879 = vpop.permute.xlu0 %1878
        %v1882 = vadd.f32 %v1866, %v1877
        %v1883 = vadd.f32 %v1867, %v1879
        %1884 = vrot.lane.b32.xlu0 %v1772, 16
        %v1885 = vpop.permute.xlu0 %1884
        %1886 = vrot.lane.b32.xlu0 %v1773, 16
        %v1887 = vpop.permute.xlu0 %1886
        %v1890 = vadd.f32 %v1874, %v1885
        %v1891 = vadd.f32 %v1875, %v1887
        %v1892 = vmul.f32 %v1448, %v1448
        %v1893 = vmul.f32 %v1450, %v1450
        %v1894 = vadd.f32 %v1882, %v1892
        %v1895 = vadd.f32 %v1883, %v1893
        %v1896 = vmul.f32 %v1452, %v1452
        %v1897 = vmul.f32 %v1454, %v1454
        %v1898 = vadd.f32 %v1890, %v1896
        %v1899 = vadd.f32 %v1891, %v1897
        %1902 = vrot.lane.b32.xlu0 %v1892, 112
        %v1903 = vpop.permute.xlu0 %1902
        %1904 = vrot.lane.b32.xlu0 %v1893, 112
        %v1905 = vpop.permute.xlu0 %1904
        %v1908 = vadd.f32 %v1894, %v1903
        %v1909 = vadd.f32 %v1895, %v1905
        %1912 = vrot.lane.b32.xlu0 %v1896, 112
        %v1913 = vpop.permute.xlu0 %1912
        %1914 = vrot.lane.b32.xlu0 %v1897, 112
        %v1915 = vpop.permute.xlu0 %1914
        %v1918 = vadd.f32 %v1898, %v1913
        %v1919 = vadd.f32 %v1899, %v1915
        %1920 = vrot.lane.b32.xlu0 %v1892, 96
        %v1921 = vpop.permute.xlu0 %1920
        %1922 = vrot.lane.b32.xlu0 %v1893, 96
        %v1923 = vpop.permute.xlu0 %1922
        %v1926 = vadd.f32 %v1908, %v1921
        %v1927 = vadd.f32 %v1909, %v1923
        %1928 = vrot.lane.b32.xlu0 %v1896, 96
        %v1929 = vpop.permute.xlu0 %1928
        %1930 = vrot.lane.b32.xlu0 %v1897, 96
        %v1931 = vpop.permute.xlu0 %1930
        %v1934 = vadd.f32 %v1918, %v1929
        %v1935 = vadd.f32 %v1919, %v1931
        %1936 = vrot.lane.b32.xlu0 %v1892, 80
        %v1937 = vpop.permute.xlu0 %1936
        %1938 = vrot.lane.b32.xlu0 %v1893, 80
        %v1939 = vpop.permute.xlu0 %1938
        %v1942 = vadd.f32 %v1926, %v1937
        %v1943 = vadd.f32 %v1927, %v1939
        %1944 = vrot.lane.b32.xlu0 %v1896, 80
        %v1945 = vpop.permute.xlu0 %1944
        %1946 = vrot.lane.b32.xlu0 %v1897, 80
        %v1947 = vpop.permute.xlu0 %1946
        %v1950 = vadd.f32 %v1934, %v1945
        %v1951 = vadd.f32 %v1935, %v1947
        %1952 = vrot.lane.b32.xlu0 %v1892, 64
        %v1953 = vpop.permute.xlu0 %1952
        %1954 = vrot.lane.b32.xlu0 %v1893, 64
        %v1955 = vpop.permute.xlu0 %1954
        %v1958 = vadd.f32 %v1942, %v1953
        %v1959 = vadd.f32 %v1943, %v1955
        %1960 = vrot.lane.b32.xlu0 %v1896, 64
        %v1961 = vpop.permute.xlu0 %1960
        %1962 = vrot.lane.b32.xlu0 %v1897, 64
        %v1963 = vpop.permute.xlu0 %1962
        %v1966 = vadd.f32 %v1950, %v1961
        %v1967 = vadd.f32 %v1951, %v1963
        %1968 = vrot.lane.b32.xlu0 %v1892, 48
        %v1969 = vpop.permute.xlu0 %1968
        %1970 = vrot.lane.b32.xlu0 %v1893, 48
        %v1971 = vpop.permute.xlu0 %1970
        %v1974 = vadd.f32 %v1958, %v1969
        %v1975 = vadd.f32 %v1959, %v1971
        %1976 = vrot.lane.b32.xlu0 %v1896, 48
        %v1977 = vpop.permute.xlu0 %1976
        %1978 = vrot.lane.b32.xlu0 %v1897, 48
        %v1979 = vpop.permute.xlu0 %1978
        %v1982 = vadd.f32 %v1966, %v1977
        %v1983 = vadd.f32 %v1967, %v1979
        %1984 = vrot.lane.b32.xlu0 %v1892, 32
        %v1985 = vpop.permute.xlu0 %1984
        %1986 = vrot.lane.b32.xlu0 %v1893, 32
        %v1987 = vpop.permute.xlu0 %1986
        %v1990 = vadd.f32 %v1974, %v1985
        %v1991 = vadd.f32 %v1975, %v1987
        %1992 = vrot.lane.b32.xlu0 %v1896, 32
        %v1993 = vpop.permute.xlu0 %1992
        %1994 = vrot.lane.b32.xlu0 %v1897, 32
        %v1995 = vpop.permute.xlu0 %1994
        %v1998 = vadd.f32 %v1982, %v1993
        %v1999 = vadd.f32 %v1983, %v1995
        %2000 = vrot.lane.b32.xlu0 %v1892, 16
        %v2001 = vpop.permute.xlu0 %2000
        %2002 = vrot.lane.b32.xlu0 %v1893, 16
        %v2003 = vpop.permute.xlu0 %2002
        %v2006 = vadd.f32 %v1990, %v2001
        %v2007 = vadd.f32 %v1991, %v2003
        %2008 = vrot.lane.b32.xlu0 %v1896, 16
        %v2009 = vpop.permute.xlu0 %2008
        %2010 = vrot.lane.b32.xlu0 %v1897, 16
        %v2011 = vpop.permute.xlu0 %2010
        %v2014 = vadd.f32 %v1998, %v2009
        %v2015 = vadd.f32 %v1999, %v2011
        %v2016 = vadd.f32 %v2006, 1e-10
        %v2017 = vadd.f32 %v2007, 1e-10
        %v2018 = vrsqrt.pop %v2016
        %v2019 = vmul.f32 %v2018, %v2016
        %v2020 = vmul.f32 %v2019, %v2018
        %v2021 = vmul.f32 0.5, %v2020
        %v2022 = vsub.f32 1.5, %v2021
        %v2023 = vmul.f32 %v2018, %v2022
        %vm2024 = vweird.f32 %v2016
        %vm2025 = vweird.f32 %v2018
        %vm2026 = vmor %vm2024, %vm2025
        %v2027 = vsel %vm2026, %v2018, %v2023
        %v2028 = vrsqrt.pop %v2017
        %v2029 = vmul.f32 %v2028, %v2017
        %v2030 = vmul.f32 %v2029, %v2028
        %v2031 = vmul.f32 0.5, %v2030
        %v2032 = vsub.f32 1.5, %v2031
        %v2033 = vmul.f32 %v2028, %v2032
        %vm2034 = vweird.f32 %v2017
        %vm2035 = vweird.f32 %v2028
        %vm2036 = vmor %vm2034, %vm2035
        %v2037 = vsel %vm2036, %v2028, %v2033
        %2040 = vrot.lane.b32.xlu0 %v2027, 16
        %v2041 = vpop.permute.xlu0 %2040
        %2042 = vrot.lane.b32.xlu0 %v2037, 16
        %v2043 = vpop.permute.xlu0 %2042
        %2046 = vrot.lane.b32.xlu0 %v2027, 32
        %v2047 = vpop.permute.xlu0 %2046
        %2048 = vrot.lane.b32.xlu0 %v2037, 32
        %v2049 = vpop.permute.xlu0 %2048
        %2052 = vrot.lane.b32.xlu0 %v2027, 48
        %v2053 = vpop.permute.xlu0 %2052
        %2054 = vrot.lane.b32.xlu0 %v2037, 48
        %v2055 = vpop.permute.xlu0 %2054
        %2058 = vrot.lane.b32.xlu0 %v2027, 64
        %v2059 = vpop.permute.xlu0 %2058
        %2060 = vrot.lane.b32.xlu0 %v2037, 64
        %v2061 = vpop.permute.xlu0 %2060
        %2064 = vrot.lane.b32.xlu0 %v2027, 80
        %v2065 = vpop.permute.xlu0 %2064
        %2066 = vrot.lane.b32.xlu0 %v2037, 80
        %v2067 = vpop.permute.xlu0 %2066
        %2070 = vrot.lane.b32.xlu0 %v2027, 96
        %v2071 = vpop.permute.xlu0 %2070
        %2072 = vrot.lane.b32.xlu0 %v2037, 96
        %v2073 = vpop.permute.xlu0 %2072
        %2076 = vrot.lane.b32.xlu0 %v2027, 112
        %v2077 = vpop.permute.xlu0 %2076
        %2078 = vrot.lane.b32.xlu0 %v2037, 112
        %v2079 = vpop.permute.xlu0 %2078
        %v2082 = vsel %vm604, %v2027, %v2041
        %v2083 = vsel %vm604, %v2037, %v2043
        %v2084 = vsel %vm724, %v2082, %v2047
        %v2085 = vsel %vm724, %v2083, %v2049
        %v2086 = vsel %vm727, %v2084, %v2053
        %v2087 = vsel %vm727, %v2085, %v2055
        %v2088 = vsel %vm730, %v2086, %v2059
        %v2089 = vsel %vm730, %v2087, %v2061
        %v2090 = vsel %vm1654, %v2088, %v2065
        %v2091 = vsel %vm1654, %v2089, %v2067
        %v2092 = vsel %vm1067, %v2090, %v2071
        %v2093 = vsel %vm1067, %v2091, %v2073
        %v2094 = vsel %vm1659, %v2092, %v2077
        %v2095 = vsel %vm1659, %v2093, %v2079
        %v2096 = vadd.f32 %v2014, 1e-10
        %v2097 = vadd.f32 %v2015, 1e-10
        %v2098 = vrsqrt.pop %v2096
        %v2099 = vmul.f32 %v2098, %v2096
        %v2100 = vmul.f32 %v2099, %v2098
        %v2101 = vmul.f32 0.5, %v2100
        %v2102 = vsub.f32 1.5, %v2101
        %v2103 = vmul.f32 %v2098, %v2102
        %vm2104 = vweird.f32 %v2096
        %vm2105 = vweird.f32 %v2098
        %vm2106 = vmor %vm2104, %vm2105
        %v2107 = vsel %vm2106, %v2098, %v2103
        %v2108 = vrsqrt.pop %v2097
        %v2109 = vmul.f32 %v2108, %v2097
        %v2110 = vmul.f32 %v2109, %v2108
        %v2111 = vmul.f32 0.5, %v2110
        %v2112 = vsub.f32 1.5, %v2111
        %v2113 = vmul.f32 %v2108, %v2112
        %vm2114 = vweird.f32 %v2097
        %vm2115 = vweird.f32 %v2108
        %vm2116 = vmor %vm2114, %vm2115
        %v2117 = vsel %vm2116, %v2108, %v2113
        %2120 = vrot.lane.b32.xlu0 %v2107, 16
        %v2121 = vpop.permute.xlu0 %2120
        %2122 = vrot.lane.b32.xlu0 %v2117, 16
        %v2123 = vpop.permute.xlu0 %2122
        %2126 = vrot.lane.b32.xlu0 %v2107, 32
        %v2127 = vpop.permute.xlu0 %2126
        %2128 = vrot.lane.b32.xlu0 %v2117, 32
        %v2129 = vpop.permute.xlu0 %2128
        %2132 = vrot.lane.b32.xlu0 %v2107, 48
        %v2133 = vpop.permute.xlu0 %2132
        %2134 = vrot.lane.b32.xlu0 %v2117, 48
        %v2135 = vpop.permute.xlu0 %2134
        %2138 = vrot.lane.b32.xlu0 %v2107, 64
        %v2139 = vpop.permute.xlu0 %2138
        %2140 = vrot.lane.b32.xlu0 %v2117, 64
        %v2141 = vpop.permute.xlu0 %2140
        %2144 = vrot.lane.b32.xlu0 %v2107, 80
        %v2145 = vpop.permute.xlu0 %2144
        %2146 = vrot.lane.b32.xlu0 %v2117, 80
        %v2147 = vpop.permute.xlu0 %2146
        %2150 = vrot.lane.b32.xlu0 %v2107, 96
        %v2151 = vpop.permute.xlu0 %2150
        %2152 = vrot.lane.b32.xlu0 %v2117, 96
        %v2153 = vpop.permute.xlu0 %2152
        %2156 = vrot.lane.b32.xlu0 %v2107, 112
        %v2157 = vpop.permute.xlu0 %2156
        %2158 = vrot.lane.b32.xlu0 %v2117, 112
        %v2159 = vpop.permute.xlu0 %2158
        %v2162 = vsel %vm604, %v2107, %v2121
        %v2163 = vsel %vm604, %v2117, %v2123
        %v2164 = vsel %vm724, %v2162, %v2127
        %v2165 = vsel %vm724, %v2163, %v2129
        %v2166 = vsel %vm727, %v2164, %v2133
        %v2167 = vsel %vm727, %v2165, %v2135
        %v2168 = vsel %vm730, %v2166, %v2139
        %v2169 = vsel %vm730, %v2167, %v2141
        %v2170 = vsel %vm1654, %v2168, %v2145
        %v2171 = vsel %vm1654, %v2169, %v2147
        %v2172 = vsel %vm1067, %v2170, %v2151
        %v2173 = vsel %vm1067, %v2171, %v2153
        %v2174 = vsel %vm1659, %v2172, %v2157
        %v2175 = vsel %vm1659, %v2173, %v2159
        %v2176 = vmul.f32 %v1447, %v2094
        %v2177 = vmul.f32 %v1448, %v2094
        %v2178 = vmul.f32 %v1449, %v2095
        %v2179 = vmul.f32 %v1450, %v2095
        %v2180 = vmul.f32 %v1451, %v2174
        %v2181 = vmul.f32 %v1452, %v2174
        %v2182 = vmul.f32 %v1453, %v2175
        %v2183 = vmul.f32 %v1454, %v2175
        %v2184 = vsub.f32 %v2176, %v2180
        %v2185 = vsub.f32 %v2177, %v2181
        %v2186 = vsub.f32 %v2178, %v2182
        %v2187 = vsub.f32 %v2179, %v2183
        %v2188 = vmul.f32 %v2184, %v2184
        %v2189 = vmul.f32 %v2185, %v2185
        %v2190 = vmul.f32 %v2186, %v2186
        %v2191 = vmul.f32 %v2187, %v2187
        %v2193 = vperm.slane %v1767, 0
        %v2194 = vperm.slane %v1767, 1
        %v2197 = vmul.f32 %v2188, %v2193
        %v2198 = vmul.f32 %v2189, %v2194
        %v2199 = vmul.f32 %v2190, %v2193
        %v2200 = vmul.f32 %v2191, %v2194
        %v2201 = vadd.f32 %v2197, %v2198
        %v2202 = vadd.f32 %v2201, %v2199
        %v2203 = vadd.f32 %v2202, %v2200
        %2204 = vadd.xlane.f32.xlu0 %v2203
        %v2205 = vpop.xlane.xlu0 %2204
        %v2206 = vrot.slane %v2205, 4
        %v2207 = vadd.f32 %v2205, %v2206
        %v2208 = vrot.slane %v2207, 2
        %v2209 = vadd.f32 %v2207, %v2208
        %v2210 = vrot.slane %v2209, 1
        %v2211 = vadd.f32 %v2209, %v2210
        %s2212 = vtos %v2211
        %v2213 = vstv %s2212
        %v2214 = vmul.f32 %v2213, 0.00390625
        %v2215 = vadd.f32 %v1766, %v2214
        %2216 = vst [vmem:[%s583] sm:$0x1] %v2215
        %p2217 = scmp.lt.s32.totalorder %s33, 1
        %s2218 = scalar_select %p2217, %s33, 1
        %s2219 = scalar_lea.vmem %s11, %s2218
        %p2220 = scmp.lt.s32.totalorder %s33, 1
        %s2221 = scalar_select %p2220, %s33, 1
        %s2222 = scalar_lea.vmem %s12, %s2221
        %p2223 = scmp.lt.s32.totalorder %s33, 1
        %s2224 = scalar_select %p2223, %s33, 1
        %s2225 = scalar_lea.vmem %s13, %s2224
        // Predicated region
        $region89: #{fn.1} parent=63 // pred_check
          %p2226 = pneg %p292
        $region90: #{fn.1} parent=63 // pred_check_branch
          %2228 = sbr.rel (%p2226) target = $region92
        $region91: #{fn.1} parent=63 // pred_region
          _
        $region92: #{fn.1} parent=63 // pred_fallthru
          _
        // Predicated region
        $region93: #{fn.1} parent=63 // pred_check
          %p2229 = pneg %p318
        $region94: #{fn.1} parent=63 // pred_check_branch
          %2231 = sbr.rel (%p2229) target = $region96
        $region95: #{fn.1} parent=63 // pred_region
          _
        $region96: #{fn.1} parent=63 // pred_fallthru
          _
        // Predicated region
        $region97: #{fn.1} parent=63 // pred_check
          %p2232 = pneg %p344
        $region98: #{fn.1} parent=63 // pred_check_branch
          %2234 = sbr.rel (%p2232) target = $region100
        $region99: #{fn.1} parent=63 // pred_region
          _
        $region100: #{fn.1} parent=63 // pred_fallthru
          _
      $region64: #{fn.1} parent=5 // pred_fallthru
        _
      %p2235 = scmp.le.s32.totalorder 2, %s28
      // Predicated region
      $region101: #{fn.1} parent=5 // pred_check
        %p2236 = pneg %p2235
      $region102: #{fn.1} parent=5 // pred_check_branch
        %2238 = sbr.rel (%p2236) target = $region104
      $region103: #{fn.1} parent=5 // pred_region
        %s2239 = ssub.s32 %s28, 2
        // Predicated region
        $region105: #{fn.1} parent=103 // pred_check
          %p2240 = pneg %p298
        $region106: #{fn.1} parent=103 // pred_check_branch
          %2242 = sbr.rel (%p2240) target = $region108
        $region107: #{fn.1} parent=103 // pred_region
          %p2243 = scmp.lt.s32.totalorder %s34, 1
          %s2244 = scalar_select %p2243, %s34, 1
          %s2245 = scalar_lea.vmem %s11, %s2244
        $region108: #{fn.1} parent=103 // pred_fallthru
          _
        // Predicated region
        $region109: #{fn.1} parent=103 // pred_check
          %p2246 = pneg %p324
        $region110: #{fn.1} parent=103 // pred_check_branch
          %2248 = sbr.rel (%p2246) target = $region112
        $region111: #{fn.1} parent=103 // pred_region
          %p2249 = scmp.lt.s32.totalorder %s34, 1
          %s2250 = scalar_select %p2249, %s34, 1
          %s2251 = scalar_lea.vmem %s12, %s2250
        $region112: #{fn.1} parent=103 // pred_fallthru
          _
        // Predicated region
        $region113: #{fn.1} parent=103 // pred_check
          %p2252 = pneg %p350
        $region114: #{fn.1} parent=103 // pred_check_branch
          %2254 = sbr.rel (%p2252) target = $region116
        $region115: #{fn.1} parent=103 // pred_region
          %p2255 = scmp.lt.s32.totalorder %s34, 1
          %s2256 = scalar_select %p2255, %s34, 1
          %s2257 = scalar_lea.vmem %s13, %s2256
        $region116: #{fn.1} parent=103 // pred_fallthru
          _
      $region104: #{fn.1} parent=5 // pred_fallthru
        _
    $region6: #{fn.1} parent=1 // loop_footer
      %s32 = sadd.s32 1, %s28
    $region7: #{fn.1} parent=1 // loop_footer_branch
      %27 = sbr.rel target = $region3
    $region8: #{fn.1} parent=1 // loop_exit
      _
    %2258 = vsyncpa [#allocation3], 1
    %s2259 = scalar_lea.sflag [#allocation3], 1
    %2260 = vsyncpa %s2259, 1
    %2261 = vsyncpa [#allocation5], 1
    %s2262 = scalar_lea.sflag [#allocation5], 1
    %2263 = vsyncpa %s2262, 1
    %2264 = vsyncpa [#allocation8], 1
    %2265 = vsyncpa [#allocation11], 1

</llo_original>
